<compile_context>
chip_gen: v7x
topology: tpu7x:2x2x1
jax: 0.10.0
libtpu: 0.0.40
codegen_flags: <defaults>
</compile_context>

<pallas_src>
import functools

import jax
import jax.numpy as jnp
from jax import lax
from jax.experimental import pallas as pl
from jax.experimental.pallas import tpu as pltpu


def _mla_kernel(x_ref, wkqv_ref, bkqv_ref, wp_ref, bp_ref, o_ref,
                kqv_ref, attn_ref, *, seq_len, emb_size, num_heads, block_b):
    """One grid step == `block_b` batch elements folded into the matmul M dim.

    x_ref    : (block_b*S, E) f32
    wkqv_ref : (E, 3*H*E) bf16, columns [K heads | Q heads | V heads], head-major,
               1/sqrt(E) scale pre-folded into the Q columns.
    bkqv_ref : (1, 3*H*E) f32
    wp_ref   : (H*E, E) bf16, head-major rows
    bp_ref   : (1, E) f32
    o_ref    : (block_b*S, E) f32
    kqv_ref  : (block_b*S, 3*H*E) f32 VMEM scratch
    attn_ref : (block_b*S, H*E)   f32 VMEM scratch (lane-dense, 128 lanes at E=32,H=4)
    """
    s, e, h = seq_len, emb_size, num_heads
    he = h * e

    # Fused K|Q|V projection: one lane-dense MXU matmul (bf16 operands, f32
    # accumulation).  Parking the result in a VMEM scratch bounds live ranges:
    # the per-head slices below are small loads instead of a 3*H*E-lane live
    # value that would blow the 64-vreg file.
    kqv_ref[...] = jnp.dot(x_ref[...].astype(jnp.bfloat16), wkqv_ref[...],
                           preferred_element_type=jnp.float32) + bkqv_ref[...]

    # Per-head attention, batched over block_b via dot_general batch dims
    # (replaces the previous block_b*H unrolled tiny-matmul loop + concats).
    # PyTorch semantics: scores = k @ q^T, softmax over the *key* axis (dim=2),
    # then softmax(scores) @ v.
    for hi in range(h):
        k3 = kqv_ref[:, hi * e:(hi + 1) * e].reshape(block_b, s, e)
        q3 = kqv_ref[:, he + hi * e:he + (hi + 1) * e].reshape(block_b, s, e)
        v3 = kqv_ref[:, 2 * he + hi * e:2 * he + (hi + 1) * e].reshape(block_b, s, e)

        # scores[b, i, j] = sum_e k3[b, i, e] * q3[b, j, e]   (== k @ q^T)
        scores = lax.dot_general(k3, q3, (((2,), (2,)), ((0,), (0,))),
                                 preferred_element_type=jnp.float32)  # (bb,S,S)

        # Softmax over the key axis i (PyTorch softmax(dim=2)), f32 math.
        m = jnp.max(scores, axis=1, keepdims=True)
        ex = jnp.exp(scores - m)
        p = ex * pl.reciprocal(jnp.sum(ex, axis=1, keepdims=True), approx=True)

        # out[b, i, e] = sum_j p[b, i, j] * v3[b, j, e]
        out = lax.dot_general(p, v3, (((2,), (1,)), ((0,), (0,))),
                              preferred_element_type=jnp.float32)     # (bb,S,E)

        # Head-major store into the lane-dense (rows, H*E) scratch -- replaces
        # the axis=1 concatenate (pure XLU shuffle) of the previous version.
        attn_ref[:, hi * e:(hi + 1) * e] = out.reshape(block_b * s, e)

    # Output projection from the lane-dense scratch: one (rows, H*E) x (H*E, E)
    # MXU matmul.  att_drop / lin_drop are identity at inference.
    o_ref[...] = (jnp.dot(attn_ref[...].astype(jnp.bfloat16), wp_ref[...],
                          preferred_element_type=jnp.float32)
                  + bp_ref[...]).astype(o_ref.dtype)
    # TODO(synk): when block_b*S is a multiple of 16 the x/out blocks could also
    # be streamed in bf16, and when block_b % 8 == 0 a lane-dense (block_b, S*E)
    # I/O slab would avoid the masked 32-lane output stores; at the demo shapes
    # (block_b*S = 8) both would violate the packed-sublane tiling rule, so only
    # the (always-legal) full-array weight blocks are bf16 here.


def _pick_block_b(batch, seq_len, max_rows=1024, min_grid=2):
    """Rows-per-step target (<= max_rows), keeping >= min_grid grid steps when
    batch allows (so both v7x TensorCores get work) and a sublane-legal
    (block_b*seq_len) % 8 == 0 block whenever possible."""
    upper = max(1, max_rows // max(seq_len, 1))
    if batch >= min_grid:
        upper = min(upper, batch // min_grid)      # keep >= min_grid grid steps
    upper = max(1, min(upper, batch))
    for bb in range(upper, 0, -1):
        if batch % bb == 0 and (bb * seq_len) % 8 == 0:
            return bb
    return batch   # grid=1 full-array block sidesteps the sublane rule


def _vmem_limit_bytes(rows, emb_size, num_heads):
    """Generation-aware VMEM budget (never exceeds physical VMEM, e.g. v7x 64 MiB)."""
    e, he = emb_size, emb_size * num_heads
    try:
        phys = int(pltpu.get_tpu_info().vmem_capacity_bytes)
    except Exception:
        phys = 64 * 1024 * 1024                        # conservative: v7x per-TC VMEM
    cap = min(100 * 1024 * 1024, (phys * 3) // 4)      # ~48 MiB v7x, ~96-100 MiB v5e/v6e

    pad = lambda n: -(-n // 128) * 128                 # lane padding of VMEM tiles
    blocks = 2 * 2 * rows * pad(e) * 4                 # x + out blocks, double-buffered f32
    weights = 2 * 2 * (e * pad(3 * he) + he * pad(e))  # bf16 weights, double-buffered
    biases = 2 * 4 * (pad(3 * he) + pad(e))            # f32 biases, double-buffered
    scratch = rows * (pad(3 * he) + pad(he)) * 4       # kqv + attn scratches
    live = rows * pad(3 * he) * 4 + (4 << 20)          # in-flight temporaries + headroom
    need = blocks + weights + biases + scratch + live
    return int(min(max(need, 16 * 1024 * 1024), cap))


def mla_forward(x, params, emb_size, num_heads, *, block_b=None):
    """params: dict with fused kernel-layout weights (w_kqv, b_kqv, w_p, b_p)."""
    b, s, e = x.shape
    assert e == emb_size
    h = num_heads
    he = h * e
    if block_b is None:
        block_b = _pick_block_b(b, s)
    assert b % block_b == 0, "batch must divide evenly by block_b"
    assert block_b == b or (block_b * s) % 8 == 0, (
        "block_b*seq_len must be a multiple of 8 unless the block covers the "
        "whole batch (TPU (8,128) sublane tiling rule)")
    grid = b // block_b
    rows = block_b * s

    kernel = functools.partial(_mla_kernel, seq_len=s, emb_size=e,
                               num_heads=h, block_b=block_b)

    # Fold batch into the matmul M dim (free reshape in the XLA wrapper).
    x2 = x.reshape(b * s, e).astype(jnp.float32)

    # Constant (grid-invariant) weight/bias blocks; resident across the grid.
    # (pipeline_mode=pl.Buffered(1) would halve their residency; negligible at
    #  E=32 so omitted here.)
    resident = lambda shape: pl.BlockSpec(shape, lambda i: (0,) * len(shape))

    out = pl.pallas_call(
        kernel,
        out_shape=jax.ShapeDtypeStruct((b * s, e), jnp.float32),
        grid_spec=pltpu.PrefetchScalarGridSpec(
            num_scalar_prefetch=0,
            grid=(grid,),
            in_specs=[
                pl.BlockSpec((rows, e), lambda i: (i, 0)),   # x block
                resident((e, 3 * he)),                       # fused Wk|Wq|Wv (bf16)
                resident((1, 3 * he)),                       # fused biases (f32)
                resident((he, e)),                           # Wp (bf16)
                resident((1, e)),                            # bp (f32)
            ],
            out_specs=pl.BlockSpec((rows, e), lambda i: (i, 0)),
            scratch_shapes=[
                pltpu.VMEM((rows, 3 * he), jnp.float32),     # fused KQV projection
                pltpu.VMEM((rows, he), jnp.float32),         # head-major attention out
            ],
        ),
        compiler_params=pltpu.CompilerParams(
            dimension_semantics=("parallel",),
            vmem_limit_bytes=_vmem_limit_bytes(rows, e, h)),
    )(x2, params["w_kqv"], params["b_kqv"], params["w_p"], params["b_p"])
    return out.reshape(b, s, e)


# ----------------------------------------------------------------------------
# Parameter construction (plain JAX glue): deterministic init + rearrangement
# into the fused, head-major layout the kernel expects.
# ----------------------------------------------------------------------------
def init_params(key, emb_size, num_heads):
    e, h = emb_size, num_heads
    keys = jax.random.split(key, 8)
    lim_in = 1.0 / (e ** 0.5)
    lim_proj = 1.0 / ((e * h) ** 0.5)

    def u(k, shape, lim):
        return jax.random.uniform(k, shape, jnp.float32, -lim, lim)

    # JAX-convention weights: y = x @ W + b  (W is (in, out)).
    Wk = u(keys[0], (e, e * h), lim_in); bk = u(keys[1], (e * h,), lim_in)
    Wq = u(keys[2], (e, e * h), lim_in); bq = u(keys[3], (e * h,), lim_in)
    Wv = u(keys[4], (e, e * h), lim_in); bv = u(keys[5], (e * h,), lim_in)
    Wp = u(keys[6], (e * h, e), lim_proj); bp = u(keys[7], (e,), lim_proj)

    # PyTorch's reshape(..., E, H) + permute means output neuron (e_out*H + h)
    # belongs to head h, feature e_out.  Re-order so each head's E features are
    # contiguous (head-major), then concatenate K|Q|V along the output dim so
    # the kernel does a single lane-dense projection matmul.
    def head_major(W):                      # (E, E*H) -> (E, H*E)
        return W.reshape(e, e, h).transpose(0, 2, 1).reshape(e, h * e)

    def head_major_bias(bvec):              # (E*H,) -> (H*E,)
        return bvec.reshape(e, h).T.reshape(h * e)

    scale = e ** (-0.5)                     # fold attention scale into Q once
    w_kqv = jnp.concatenate(
        [head_major(Wk), head_major(Wq) * scale, head_major(Wv)], axis=1)
    b_kqv = jnp.concatenate(
        [head_major_bias(bk), head_major_bias(bq) * scale, head_major_bias(bv)]
    ).reshape(1, 3 * h * e)

    flat = dict(Wk=Wk, bk=bk, Wq=Wq, bq=bq, Wv=Wv, bv=bv, Wp=Wp, bp=bp)
    fused = dict(w_kqv=w_kqv.astype(jnp.bfloat16),       # streamed in bf16
                 b_kqv=b_kqv,                            # biases stay f32
                 w_p=Wp.astype(jnp.bfloat16),
                 b_p=bp.reshape(1, e))
    return flat, fused


def mla_reference(x, flat, emb_size, num_heads):
    """Pure-JAX transcription of the PyTorch forward (dropout = identity)."""
    b, s, e = x.shape
    h = num_heads
    hp = jax.lax.Precision.HIGHEST
    k = jnp.einsum("bse,ef->bsf", x, flat["Wk"], precision=hp) + flat["bk"]
    q = jnp.einsum("bse,ef->bsf", x, flat["Wq"], precision=hp) + flat["bq"]
    v = jnp.einsum("bse,ef->bsf", x, flat["Wv"], precision=hp) + flat["bv"]
    k = k.reshape(b, s, e, h).transpose(0, 3, 1, 2)   # (B,H,S,E)
    q = q.reshape(b, s, e, h).transpose(0, 3, 1, 2)
    v = v.reshape(b, s, e, h).transpose(0, 3, 1, 2)
    matrix = jnp.einsum("bhie,bhje->bhij", k, q, precision=hp) * (e ** -0.5)
    p = jax.nn.softmax(matrix, axis=2)                # softmax over dim=2 (keys)
    out = jnp.einsum("bhij,bhje->bhie", p, v, precision=hp)
    out = out.transpose(0, 2, 1, 3).reshape(b, s, h * e)
    return jnp.einsum("bsf,fe->bse", out, flat["Wp"], precision=hp) + flat["bp"]


if __name__ == "__main__":
    B, S, E, H = 2, 8, 32, 4          # batch, seq, emb_size, num_heads
    key = jax.random.PRNGKey(0)
    kx, kp = jax.random.split(key)
    x = jax.random.normal(kx, (B, S, E), jnp.float32)

    flat, fused = init_params(kp, E, H)

    out = jax.block_until_ready(mla_forward(x, fused, E, H))
    ref = mla_reference(x, flat, E, H)
    assert out.shape == (B, S, E)

    # Tolerance accounts for bf16-streamed weights, default (single-pass bf16)
    # MXU precision and the approximate softmax reciprocal vs. the
    # HIGHEST-precision f32 reference.  Inference-grade only.
    err = float(jnp.max(jnp.abs(out - ref)))
    assert jnp.allclose(out, ref, rtol=3e-2, atol=3e-2), err

    print("KERNEL_OK")
</pallas_src>

<mosaic_0001>
module attributes {stable_mosaic.version = 11 : i64} {
  func.func @_mla_kernel(%arg0: i32, %arg1: memref<8x32xf32, #tpu.memory_space<vmem>>, %arg2: memref<32x384xbf16, #tpu.memory_space<vmem>>, %arg3: memref<1x384xf32, #tpu.memory_space<vmem>>, %arg4: memref<128x32xbf16, #tpu.memory_space<vmem>>, %arg5: memref<1x32xf32, #tpu.memory_space<vmem>>, %arg6: memref<8x32xf32, #tpu.memory_space<vmem>>, %arg7: memref<8x384xf32, #tpu.memory_space<vmem>>, %arg8: memref<8x128xf32, #tpu.memory_space<vmem>>) attributes {dimension_semantics = [#tpu.dimension_semantics<parallel>], iteration_bounds = array<i64: 2>, scalar_prefetch = 0 : i64, scratch_operands = 2 : i64, tpu.core_type = #tpu.core_type<tc>, window_params = [{transform_indices = @transform_0, window_bounds = array<i64: 8, 32>}, {pipeline_mode = #tpu.pipeline_mode<synchronous>, transform_indices = @transform_1, window_bounds = array<i64: 32, 384>}, {pipeline_mode = #tpu.pipeline_mode<synchronous>, transform_indices = @transform_2, window_bounds = array<i64: 1, 384>}, {pipeline_mode = #tpu.pipeline_mode<synchronous>, transform_indices = @transform_3, window_bounds = array<i64: 128, 32>}, {pipeline_mode = #tpu.pipeline_mode<synchronous>, transform_indices = @transform_4, window_bounds = array<i64: 1, 32>}, {transform_indices = @transform_5, window_bounds = array<i64: 8, 32>}]} {
    %c0 = arith.constant 0 : index
    %c0_0 = arith.constant 0 : index
    %0 = vector.load %arg1[%c0, %c0_0] : memref<8x32xf32, #tpu.memory_space<vmem>>, vector<8x32xf32>
    %1 = arith.truncf %0 : vector<8x32xf32> to vector<8x32xbf16>
    %c0_1 = arith.constant 0 : index
    %c0_2 = arith.constant 0 : index
    %2 = vector.load %arg2[%c0_1, %c0_2] : memref<32x384xbf16, #tpu.memory_space<vmem>>, vector<32x384xbf16>
    %cst = arith.constant dense<0.000000e+00> : vector<8x384xf32>
    %3 = tpu.matmul %1, %2, %cst {dimension_numbers = #tpu.dot_dimension_numbers<[1], [0], [0], [1], [0, 0, 1, 1], [], []>} : vector<8x32xbf16>, vector<32x384xbf16>, vector<8x384xf32> -> vector<8x384xf32>
    %c0_3 = arith.constant 0 : index
    %c0_4 = arith.constant 0 : index
    %4 = vector.load %arg3[%c0_3, %c0_4] : memref<1x384xf32, #tpu.memory_space<vmem>>, vector<1x384xf32>
    %5 = vector.broadcast %4 : vector<1x384xf32> to vector<8x384xf32>
    %6 = arith.addf %3, %5 : vector<8x384xf32>
    %c0_5 = arith.constant 0 : index
    %c0_6 = arith.constant 0 : index
    %7 = vector.load %arg7[%c0_5, %c0_6] : memref<8x384xf32, #tpu.memory_space<vmem>>, vector<8x384xf32>
    tpu.vector_store %arg7[%c0_5, %c0_6], %6 {strides = array<i32>} : memref<8x384xf32, #tpu.memory_space<vmem>>, vector<8x384xf32>,
    %c0_7 = arith.constant 0 : index
    %c0_8 = arith.constant 0 : index
    %8 = vector.load %arg7[%c0_7, %c0_8] : memref<8x384xf32, #tpu.memory_space<vmem>>, vector<8x32xf32>
    %9 = vector.shape_cast %8 : vector<8x32xf32> to vector<1x8x32xf32>
    %c0_9 = arith.constant 0 : index
    %c128 = arith.constant 128 : index
    %10 = vector.load %arg7[%c0_9, %c128] : memref<8x384xf32, #tpu.memory_space<vmem>>, vector<8x32xf32>
    %11 = vector.shape_cast %10 : vector<8x32xf32> to vector<1x8x32xf32>
    %c0_10 = arith.constant 0 : index
    %c256 = arith.constant 256 : index
    %12 = vector.load %arg7[%c0_10, %c256] : memref<8x384xf32, #tpu.memory_space<vmem>>, vector<8x32xf32>
    %13 = vector.shape_cast %12 : vector<8x32xf32> to vector<1x8x32xf32>
    %cst_11 = arith.constant dense<0.000000e+00> : vector<1x8x8xf32>
    %14 = tpu.matmul %9, %11, %cst_11 {dimension_numbers = #tpu.dot_dimension_numbers<[2], [2], [1], [1], [0, 0, 0, 1, 1, 1], [0], [0]>} : vector<1x8x32xf32>, vector<1x8x32xf32>, vector<1x8x8xf32> -> vector<1x8x8xf32>
    %cst_12 = arith.constant dense<0xFF800000> : vector<1x8xf32>
    %15 = vector.multi_reduction <maximumf>, %14, %cst_12 [1] : vector<1x8x8xf32> to vector<1x8xf32>
    %16 = vector.shape_cast %15 : vector<1x8xf32> to vector<1x1x8xf32>
    %17 = vector.broadcast %16 : vector<1x1x8xf32> to vector<1x8x8xf32>
    %18 = arith.subf %14, %17 : vector<1x8x8xf32>
    %19 = math.exp %18 : vector<1x8x8xf32>
    %cst_13 = arith.constant dense<0.000000e+00> : vector<1x8xf32>
    %20 = vector.multi_reduction <add>, %19, %cst_13 [1] : vector<1x8x8xf32> to vector<1x8xf32>
    %21 = vector.shape_cast %20 : vector<1x8xf32> to vector<1x1x8xf32>
    %22 = tpu.reciprocal %21 {approx = true} : vector<1x1x8xf32> -> vector<1x1x8xf32>
    %23 = vector.broadcast %22 : vector<1x1x8xf32> to vector<1x8x8xf32>
    %24 = arith.mulf %19, %23 : vector<1x8x8xf32>
    %cst_14 = arith.constant dense<0.000000e+00> : vector<1x8x32xf32>
    %25 = tpu.matmul %24, %13, %cst_14 {dimension_numbers = #tpu.dot_dimension_numbers<[2], [1], [1], [2], [0, 0, 0, 1, 1, 2], [0], [0]>} : vector<1x8x8xf32>, vector<1x8x32xf32>, vector<1x8x32xf32> -> vector<1x8x32xf32>
    %26 = vector.shape_cast %25 : vector<1x8x32xf32> to vector<8x32xf32>
    %c0_15 = arith.constant 0 : index
    %c0_16 = arith.constant 0 : index
    %27 = vector.load %arg8[%c0_15, %c0_16] : memref<8x128xf32, #tpu.memory_space<vmem>>, vector<8x32xf32>
    tpu.vector_store %arg8[%c0_15, %c0_16], %26 {strides = array<i32>} : memref<8x128xf32, #tpu.memory_space<vmem>>, vector<8x32xf32>,
    %c0_17 = arith.constant 0 : index
    %c32 = arith.constant 32 : index
    %28 = vector.load %arg7[%c0_17, %c32] : memref<8x384xf32, #tpu.memory_space<vmem>>, vector<8x32xf32>
    %29 = vector.shape_cast %28 : vector<8x32xf32> to vector<1x8x32xf32>
    %c0_18 = arith.constant 0 : index
    %c160 = arith.constant 160 : index
    %30 = vector.load %arg7[%c0_18, %c160] : memref<8x384xf32, #tpu.memory_space<vmem>>, vector<8x32xf32>
    %31 = vector.shape_cast %30 : vector<8x32xf32> to vector<1x8x32xf32>
    %c0_19 = arith.constant 0 : index
    %c288 = arith.constant 288 : index
    %32 = vector.load %arg7[%c0_19, %c288] : memref<8x384xf32, #tpu.memory_space<vmem>>, vector<8x32xf32>
    %33 = vector.shape_cast %32 : vector<8x32xf32> to vector<1x8x32xf32>
    %cst_20 = arith.constant dense<0.000000e+00> : vector<1x8x8xf32>
    %34 = tpu.matmul %29, %31, %cst_20 {dimension_numbers = #tpu.dot_dimension_numbers<[2], [2], [1], [1], [0, 0, 0, 1, 1, 1], [0], [0]>} : vector<1x8x32xf32>, vector<1x8x32xf32>, vector<1x8x8xf32> -> vector<1x8x8xf32>
    %cst_21 = arith.constant dense<0xFF800000> : vector<1x8xf32>
    %35 = vector.multi_reduction <maximumf>, %34, %cst_21 [1] : vector<1x8x8xf32> to vector<1x8xf32>
    %36 = vector.shape_cast %35 : vector<1x8xf32> to vector<1x1x8xf32>
    %37 = vector.broadcast %36 : vector<1x1x8xf32> to vector<1x8x8xf32>
    %38 = arith.subf %34, %37 : vector<1x8x8xf32>
    %39 = math.exp %38 : vector<1x8x8xf32>
    %cst_22 = arith.constant dense<0.000000e+00> : vector<1x8xf32>
    %40 = vector.multi_reduction <add>, %39, %cst_22 [1] : vector<1x8x8xf32> to vector<1x8xf32>
    %41 = vector.shape_cast %40 : vector<1x8xf32> to vector<1x1x8xf32>
    %42 = tpu.reciprocal %41 {approx = true} : vector<1x1x8xf32> -> vector<1x1x8xf32>
    %43 = vector.broadcast %42 : vector<1x1x8xf32> to vector<1x8x8xf32>
    %44 = arith.mulf %39, %43 : vector<1x8x8xf32>
    %cst_23 = arith.constant dense<0.000000e+00> : vector<1x8x32xf32>
    %45 = tpu.matmul %44, %33, %cst_23 {dimension_numbers = #tpu.dot_dimension_numbers<[2], [1], [1], [2], [0, 0, 0, 1, 1, 2], [0], [0]>} : vector<1x8x8xf32>, vector<1x8x32xf32>, vector<1x8x32xf32> -> vector<1x8x32xf32>
    %46 = vector.shape_cast %45 : vector<1x8x32xf32> to vector<8x32xf32>
    %c0_24 = arith.constant 0 : index
    %c32_25 = arith.constant 32 : index
    %47 = vector.load %arg8[%c0_24, %c32_25] : memref<8x128xf32, #tpu.memory_space<vmem>>, vector<8x32xf32>
    tpu.vector_store %arg8[%c0_24, %c32_25], %46 {strides = array<i32>} : memref<8x128xf32, #tpu.memory_space<vmem>>, vector<8x32xf32>,
    %c0_26 = arith.constant 0 : index
    %c64 = arith.constant 64 : index
    %48 = vector.load %arg7[%c0_26, %c64] : memref<8x384xf32, #tpu.memory_space<vmem>>, vector<8x32xf32>
    %49 = vector.shape_cast %48 : vector<8x32xf32> to vector<1x8x32xf32>
    %c0_27 = arith.constant 0 : index
    %c192 = arith.constant 192 : index
    %50 = vector.load %arg7[%c0_27, %c192] : memref<8x384xf32, #tpu.memory_space<vmem>>, vector<8x32xf32>
    %51 = vector.shape_cast %50 : vector<8x32xf32> to vector<1x8x32xf32>
    %c0_28 = arith.constant 0 : index
    %c320 = arith.constant 320 : index
    %52 = vector.load %arg7[%c0_28, %c320] : memref<8x384xf32, #tpu.memory_space<vmem>>, vector<8x32xf32>
    %53 = vector.shape_cast %52 : vector<8x32xf32> to vector<1x8x32xf32>
    %cst_29 = arith.constant dense<0.000000e+00> : vector<1x8x8xf32>
    %54 = tpu.matmul %49, %51, %cst_29 {dimension_numbers = #tpu.dot_dimension_numbers<[2], [2], [1], [1], [0, 0, 0, 1, 1, 1], [0], [0]>} : vector<1x8x32xf32>, vector<1x8x32xf32>, vector<1x8x8xf32> -> vector<1x8x8xf32>
    %cst_30 = arith.constant dense<0xFF800000> : vector<1x8xf32>
    %55 = vector.multi_reduction <maximumf>, %54, %cst_30 [1] : vector<1x8x8xf32> to vector<1x8xf32>
    %56 = vector.shape_cast %55 : vector<1x8xf32> to vector<1x1x8xf32>
    %57 = vector.broadcast %56 : vector<1x1x8xf32> to vector<1x8x8xf32>
    %58 = arith.subf %54, %57 : vector<1x8x8xf32>
    %59 = math.exp %58 : vector<1x8x8xf32>
    %cst_31 = arith.constant dense<0.000000e+00> : vector<1x8xf32>
    %60 = vector.multi_reduction <add>, %59, %cst_31 [1] : vector<1x8x8xf32> to vector<1x8xf32>
    %61 = vector.shape_cast %60 : vector<1x8xf32> to vector<1x1x8xf32>
    %62 = tpu.reciprocal %61 {approx = true} : vector<1x1x8xf32> -> vector<1x1x8xf32>
    %63 = vector.broadcast %62 : vector<1x1x8xf32> to vector<1x8x8xf32>
    %64 = arith.mulf %59, %63 : vector<1x8x8xf32>
    %cst_32 = arith.constant dense<0.000000e+00> : vector<1x8x32xf32>
    %65 = tpu.matmul %64, %53, %cst_32 {dimension_numbers = #tpu.dot_dimension_numbers<[2], [1], [1], [2], [0, 0, 0, 1, 1, 2], [0], [0]>} : vector<1x8x8xf32>, vector<1x8x32xf32>, vector<1x8x32xf32> -> vector<1x8x32xf32>
    %66 = vector.shape_cast %65 : vector<1x8x32xf32> to vector<8x32xf32>
    %c0_33 = arith.constant 0 : index
    %c64_34 = arith.constant 64 : index
    %67 = vector.load %arg8[%c0_33, %c64_34] : memref<8x128xf32, #tpu.memory_space<vmem>>, vector<8x32xf32>
    tpu.vector_store %arg8[%c0_33, %c64_34], %66 {strides = array<i32>} : memref<8x128xf32, #tpu.memory_space<vmem>>, vector<8x32xf32>,
    %c0_35 = arith.constant 0 : index
    %c96 = arith.constant 96 : index
    %68 = vector.load %arg7[%c0_35, %c96] : memref<8x384xf32, #tpu.memory_space<vmem>>, vector<8x32xf32>
    %69 = vector.shape_cast %68 : vector<8x32xf32> to vector<1x8x32xf32>
    %c0_36 = arith.constant 0 : index
    %c224 = arith.constant 224 : index
    %70 = vector.load %arg7[%c0_36, %c224] : memref<8x384xf32, #tpu.memory_space<vmem>>, vector<8x32xf32>
    %71 = vector.shape_cast %70 : vector<8x32xf32> to vector<1x8x32xf32>
    %c0_37 = arith.constant 0 : index
    %c352 = arith.constant 352 : index
    %72 = vector.load %arg7[%c0_37, %c352] : memref<8x384xf32, #tpu.memory_space<vmem>>, vector<8x32xf32>
    %73 = vector.shape_cast %72 : vector<8x32xf32> to vector<1x8x32xf32>
    %cst_38 = arith.constant dense<0.000000e+00> : vector<1x8x8xf32>
    %74 = tpu.matmul %69, %71, %cst_38 {dimension_numbers = #tpu.dot_dimension_numbers<[2], [2], [1], [1], [0, 0, 0, 1, 1, 1], [0], [0]>} : vector<1x8x32xf32>, vector<1x8x32xf32>, vector<1x8x8xf32> -> vector<1x8x8xf32>
    %cst_39 = arith.constant dense<0xFF800000> : vector<1x8xf32>
    %75 = vector.multi_reduction <maximumf>, %74, %cst_39 [1] : vector<1x8x8xf32> to vector<1x8xf32>
    %76 = vector.shape_cast %75 : vector<1x8xf32> to vector<1x1x8xf32>
    %77 = vector.broadcast %76 : vector<1x1x8xf32> to vector<1x8x8xf32>
    %78 = arith.subf %74, %77 : vector<1x8x8xf32>
    %79 = math.exp %78 : vector<1x8x8xf32>
    %cst_40 = arith.constant dense<0.000000e+00> : vector<1x8xf32>
    %80 = vector.multi_reduction <add>, %79, %cst_40 [1] : vector<1x8x8xf32> to vector<1x8xf32>
    %81 = vector.shape_cast %80 : vector<1x8xf32> to vector<1x1x8xf32>
    %82 = tpu.reciprocal %81 {approx = true} : vector<1x1x8xf32> -> vector<1x1x8xf32>
    %83 = vector.broadcast %82 : vector<1x1x8xf32> to vector<1x8x8xf32>
    %84 = arith.mulf %79, %83 : vector<1x8x8xf32>
    %cst_41 = arith.constant dense<0.000000e+00> : vector<1x8x32xf32>
    %85 = tpu.matmul %84, %73, %cst_41 {dimension_numbers = #tpu.dot_dimension_numbers<[2], [1], [1], [2], [0, 0, 0, 1, 1, 2], [0], [0]>} : vector<1x8x8xf32>, vector<1x8x32xf32>, vector<1x8x32xf32> -> vector<1x8x32xf32>
    %86 = vector.shape_cast %85 : vector<1x8x32xf32> to vector<8x32xf32>
    %c0_42 = arith.constant 0 : index
    %c96_43 = arith.constant 96 : index
    %87 = vector.load %arg8[%c0_42, %c96_43] : memref<8x128xf32, #tpu.memory_space<vmem>>, vector<8x32xf32>
    tpu.vector_store %arg8[%c0_42, %c96_43], %86 {strides = array<i32>} : memref<8x128xf32, #tpu.memory_space<vmem>>, vector<8x32xf32>,
    %c0_44 = arith.constant 0 : index
    %c0_45 = arith.constant 0 : index
    %88 = vector.load %arg8[%c0_44, %c0_45] : memref<8x128xf32, #tpu.memory_space<vmem>>, vector<8x128xf32>
    %89 = arith.truncf %88 : vector<8x128xf32> to vector<8x128xbf16>
    %c0_46 = arith.constant 0 : index
    %c0_47 = arith.constant 0 : index
    %90 = vector.load %arg4[%c0_46, %c0_47] : memref<128x32xbf16, #tpu.memory_space<vmem>>, vector<128x32xbf16>
    %cst_48 = arith.constant dense<0.000000e+00> : vector<8x32xf32>
    %91 = tpu.matmul %89, %90, %cst_48 {dimension_numbers = #tpu.dot_dimension_numbers<[1], [0], [0], [1], [0, 0, 1, 1], [], []>} : vector<8x128xbf16>, vector<128x32xbf16>, vector<8x32xf32> -> vector<8x32xf32>
    %c0_49 = arith.constant 0 : index
    %c0_50 = arith.constant 0 : index
    %92 = vector.load %arg5[%c0_49, %c0_50] : memref<1x32xf32, #tpu.memory_space<vmem>>, vector<1x32xf32>
    %93 = vector.broadcast %92 : vector<1x32xf32> to vector<8x32xf32>
    %94 = arith.addf %91, %93 : vector<8x32xf32>
    %c0_51 = arith.constant 0 : index
    %c0_52 = arith.constant 0 : index
    %95 = vector.load %arg6[%c0_51, %c0_52] : memref<8x32xf32, #tpu.memory_space<vmem>>, vector<8x32xf32>
    tpu.vector_store %arg6[%c0_51, %c0_52], %94 {strides = array<i32>} : memref<8x32xf32, #tpu.memory_space<vmem>>, vector<8x32xf32>,
    return
  }
  func.func @transform_0(%arg0: i32) -> (i32, i32) {
    %c0_i32 = arith.constant 0 : i32
    %c0_i32_0 = arith.constant 0 : i32
    return %arg0, %c0_i32 : i32, i32
  }
  func.func @transform_1(%arg0: i32) -> (i32, i32) {
    %c0_i32 = arith.constant 0 : i32
    %c0_i32_0 = arith.constant 0 : i32
    %c0_i32_1 = arith.constant 0 : i32
    return %c0_i32, %c0_i32_0 : i32, i32
  }
  func.func @transform_2(%arg0: i32) -> (i32, i32) {
    %c0_i32 = arith.constant 0 : i32
    %c0_i32_0 = arith.constant 0 : i32
    %c0_i32_1 = arith.constant 0 : i32
    return %c0_i32, %c0_i32_0 : i32, i32
  }
  func.func @transform_3(%arg0: i32) -> (i32, i32) {
    %c0_i32 = arith.constant 0 : i32
    %c0_i32_0 = arith.constant 0 : i32
    %c0_i32_1 = arith.constant 0 : i32
    return %c0_i32, %c0_i32_0 : i32, i32
  }
  func.func @transform_4(%arg0: i32) -> (i32, i32) {
    %c0_i32 = arith.constant 0 : i32
    %c0_i32_0 = arith.constant 0 : i32
    %c0_i32_1 = arith.constant 0 : i32
    return %c0_i32, %c0_i32_0 : i32, i32
  }
  func.func @transform_5(%arg0: i32) -> (i32, i32) {
    %c0_i32 = arith.constant 0 : i32
    %c0_i32_0 = arith.constant 0 : i32
    return %arg0, %c0_i32 : i32, i32
  }
}

</mosaic_0001>

<llo_original>
// kernel: tpu_custom_call.1
$region0: #{tpu_custom_call.1}
  #allocation0 [shape = 'u32[]', space=smem, size = 0x4, offset = 0x4, fixed_abs, tag = 'smem constant byte address 0x4 - core index']
  #allocation1 [shape = 'u32[144,128]{1,0:T(1,128)}', space=vmem, size = 0x12000, scoped, tag = 'internal scratch']
  #allocation2 [shape = 'f32[8,384]{1,0:T(8,128)}', space=vmem, size = 0x3000, scoped, tag = 'scratch operand']
  #allocation3 [shape = 'f32[8,128]{1,0:T(8,128)}', space=vmem, size = 0x1000, scoped, tag = 'scratch operand']
  %s0 = inlined_call_operand.vmem [shape: f32[16,32], index: 0, kind: input, shape index: {}]
  %s1 = inlined_call_operand.vmem [shape: bf16[32,384], index: 1, kind: input, shape index: {}]
  %s2 = inlined_call_operand.vmem [shape: f32[1,384], index: 2, kind: input, shape index: {}]
  %s3 = inlined_call_operand.vmem [shape: bf16[128,32], index: 3, kind: input, shape index: {}]
  %s4 = inlined_call_operand.vmem [shape: f32[1,32], index: 4, kind: input, shape index: {}]
  %s5 = inlined_call_operand.hbm [shape: f32[16,32], index: 5, kind: output, shape index: {}]
  %s6 = sld [smem:[#allocation0]]
  $region53: #{tpu_custom_call.1} parent=0
    _
  %s8 = ssub.s32 1, %s6
  %s9 = scalar_select 0, %s8, %s6
  $region1: #{tpu_custom_call.1} parent=0
    #allocation4 [shape = 'u8[8192]{0}', space=vmem, size = 0x2000, scoped, tag = 'output window, operand 0']
    #allocation5 [shape = 's32[2]{0}', space=sflag, size = 0x8, scoped, tag = 'scoped memory for tpu_custom_call.1']
    %10 = vsyncpa [#allocation5], 0
    %s11 = scalar_lea.sflag [#allocation5], 1
    %12 = vsyncpa %s11, 0
    loop: start=0, step=1, limit=4
    $region2: #{tpu_custom_call.1} parent=1 // loop_pre_header
      _
    $region3: #{tpu_custom_call.1} parent=1 // loop_header
      %s14 = sphi 0, %s18
      %p15 = scmp.ge.s32.totalorder %s14, 4
      %s24 = sphi 0, %s26
      %s27 = sphi 0, %s24
      %s28 = sphi 0, %s27
      %s44 = sphi 0, %s28
      %s48 = sphi 0, %s48
      %s50 = sphi 0, %s48
      %s51 = sphi 0, %s50
      %s65 = sphi 0, %s51
      %s69 = sphi 0, %s69
      %s71 = sphi 0, %s69
      %s72 = sphi 0, %s71
      %s86 = sphi 0, %s72
      %s90 = sphi 0, %s90
      %s92 = sphi 0, %s90
      %s93 = sphi 0, %s92
      %s107 = sphi 0, %s93
      %s111 = sphi 0, %s111
      %s113 = sphi 0, %s111
      %s114 = sphi 0, %s113
      %s128 = sphi 0, %s114
      %s134 = sphi 0, %s136
      %s137 = sphi 0, %s134
      %s138 = sphi 0, %s137
      %s154 = sphi 0, %s138
    $region4: #{tpu_custom_call.1} parent=1 // loop_header_branch
      %17 = sbr.rel (%p15) target = $region8
    $region5: #{tpu_custom_call.1} parent=1 // loop_body
      %s19 = ssub.s32 %s14, 1
      %s20 = ssub.s32 %s14, 2
      %s21 = sadd.s32 %s14, 1
      %s22 = ssub.s32 %s14, %s21
      %p23 = scmp.eq.s32.totalorder %s22, 0
      %s25 = sadd.s32 %s24, 1
      %s26 = scalar_select %p23, %s24, %s25
      %p29 = pneg %p23
      %p30 = scmp.eq.s32.totalorder %s14, 1
      %p31 = por %p29, %p30
      %p32 = scmp.ne.s32.totalorder %s24, %s27
      %p33 = scmp.eq.s32.totalorder %s14, 0
      %p34 = por %p32, %p33
      %p35 = scmp.ne.s32.totalorder %s24, %s27
      %p36 = scmp.eq.s32.totalorder %s19, 1
      %p37 = por %p35, %p36
      %p38 = scmp.ne.s32.totalorder %s27, %s28
      %p39 = scmp.eq.s32.totalorder %s19, 0
      %p40 = por %p38, %p39
      %p41 = scmp.ne.s32.totalorder %s27, %s28
      %p42 = scmp.eq.s32.totalorder %s20, 1
      %p43 = por %p41, %p42
      %p45 = scmp.ne.s32.totalorder %s28, %s44
      %p46 = scmp.eq.s32.totalorder %s20, 0
      %p47 = por %p45, %p46
      %s49 = sadd.s32 %s48, 1
      %p52 = scmp.eq.s32.totalorder %s14, 1
      %p53 = scmp.ne.s32.totalorder %s48, %s50
      %p54 = scmp.eq.s32.totalorder %s14, 0
      %p55 = por %p53, %p54
      %p56 = scmp.ne.s32.totalorder %s48, %s50
      %p57 = scmp.eq.s32.totalorder %s19, 1
      %p58 = por %p56, %p57
      %p59 = scmp.ne.s32.totalorder %s50, %s51
      %p60 = scmp.eq.s32.totalorder %s19, 0
      %p61 = por %p59, %p60
      %p62 = scmp.ne.s32.totalorder %s50, %s51
      %p63 = scmp.eq.s32.totalorder %s20, 1
      %p64 = por %p62, %p63
      %p66 = scmp.ne.s32.totalorder %s51, %s65
      %p67 = scmp.eq.s32.totalorder %s20, 0
      %p68 = por %p66, %p67
      %s70 = sadd.s32 %s69, 1
      %p73 = scmp.eq.s32.totalorder %s14, 1
      %p74 = scmp.ne.s32.totalorder %s69, %s71
      %p75 = scmp.eq.s32.totalorder %s14, 0
      %p76 = por %p74, %p75
      %p77 = scmp.ne.s32.totalorder %s69, %s71
      %p78 = scmp.eq.s32.totalorder %s19, 1
      %p79 = por %p77, %p78
      %p80 = scmp.ne.s32.totalorder %s71, %s72
      %p81 = scmp.eq.s32.totalorder %s19, 0
      %p82 = por %p80, %p81
      %p83 = scmp.ne.s32.totalorder %s71, %s72
      %p84 = scmp.eq.s32.totalorder %s20, 1
      %p85 = por %p83, %p84
      %p87 = scmp.ne.s32.totalorder %s72, %s86
      %p88 = scmp.eq.s32.totalorder %s20, 0
      %p89 = por %p87, %p88
      %s91 = sadd.s32 %s90, 1
      %p94 = scmp.eq.s32.totalorder %s14, 1
      %p95 = scmp.ne.s32.totalorder %s90, %s92
      %p96 = scmp.eq.s32.totalorder %s14, 0
      %p97 = por %p95, %p96
      %p98 = scmp.ne.s32.totalorder %s90, %s92
      %p99 = scmp.eq.s32.totalorder %s19, 1
      %p100 = por %p98, %p99
      %p101 = scmp.ne.s32.totalorder %s92, %s93
      %p102 = scmp.eq.s32.totalorder %s19, 0
      %p103 = por %p101, %p102
      %p104 = scmp.ne.s32.totalorder %s92, %s93
      %p105 = scmp.eq.s32.totalorder %s20, 1
      %p106 = por %p104, %p105
      %p108 = scmp.ne.s32.totalorder %s93, %s107
      %p109 = scmp.eq.s32.totalorder %s20, 0
      %p110 = por %p108, %p109
      %s112 = sadd.s32 %s111, 1
      %p115 = scmp.eq.s32.totalorder %s14, 1
      %p116 = scmp.ne.s32.totalorder %s111, %s113
      %p117 = scmp.eq.s32.totalorder %s14, 0
      %p118 = por %p116, %p117
      %p119 = scmp.ne.s32.totalorder %s111, %s113
      %p120 = scmp.eq.s32.totalorder %s19, 1
      %p121 = por %p119, %p120
      %p122 = scmp.ne.s32.totalorder %s113, %s114
      %p123 = scmp.eq.s32.totalorder %s19, 0
      %p124 = por %p122, %p123
      %p125 = scmp.ne.s32.totalorder %s113, %s114
      %p126 = scmp.eq.s32.totalorder %s20, 1
      %p127 = por %p125, %p126
      %p129 = scmp.ne.s32.totalorder %s114, %s128
      %p130 = scmp.eq.s32.totalorder %s20, 0
      %p131 = por %p129, %p130
      %s132 = ssub.s32 %s14, %s21
      %p133 = scmp.eq.s32.totalorder %s132, 0
      %s135 = sadd.s32 %s134, 1
      %s136 = scalar_select %p133, %s134, %s135
      %p139 = pneg %p133
      %p140 = scmp.eq.s32.totalorder %s14, 1
      %p141 = por %p139, %p140
      %p142 = scmp.ne.s32.totalorder %s134, %s137
      %p143 = scmp.eq.s32.totalorder %s14, 0
      %p144 = por %p142, %p143
      %p145 = scmp.ne.s32.totalorder %s134, %s137
      %p146 = scmp.eq.s32.totalorder %s19, 1
      %p147 = por %p145, %p146
      %p148 = scmp.ne.s32.totalorder %s137, %s138
      %p149 = scmp.eq.s32.totalorder %s19, 0
      %p150 = por %p148, %p149
      %p151 = scmp.ne.s32.totalorder %s137, %s138
      %p152 = scmp.eq.s32.totalorder %s20, 1
      %p153 = por %p151, %p152
      %p155 = scmp.ne.s32.totalorder %s138, %s154
      %p156 = scmp.eq.s32.totalorder %s20, 0
      %p157 = por %p155, %p156
      %p158 = scmp.le.s32.totalorder 1, %s14
      %p159 = scmp.lt.s32.totalorder %s14, 3
      %p160 = pnand %p158, %p159
      %p161 = pneg %p160
      // Predicated region
      $region9: #{tpu_custom_call.1} parent=5 // pred_check
        _
      $region10: #{tpu_custom_call.1} parent=5 // pred_check_branch
        %163 = sbr.rel (%p160) target = $region12
      $region11: #{tpu_custom_call.1} parent=5 // pred_region
        %s164 = ssub.s32 %s14, 1
        // Predicated region
        $region13: #{tpu_custom_call.1} parent=11 // pred_check
          %p165 = pneg %p61
        $region14: #{tpu_custom_call.1} parent=11 // pred_check_branch
          %167 = sbr.rel (%p165) target = $region16
        $region15: #{tpu_custom_call.1} parent=11 // pred_region
          _
        $region16: #{tpu_custom_call.1} parent=11 // pred_fallthru
          _
        // Predicated region
        $region17: #{tpu_custom_call.1} parent=11 // pred_check
          %p168 = pneg %p82
        $region18: #{tpu_custom_call.1} parent=11 // pred_check_branch
          %170 = sbr.rel (%p168) target = $region20
        $region19: #{tpu_custom_call.1} parent=11 // pred_region
          _
        $region20: #{tpu_custom_call.1} parent=11 // pred_fallthru
          _
        // Predicated region
        $region21: #{tpu_custom_call.1} parent=11 // pred_check
          %p171 = pneg %p103
        $region22: #{tpu_custom_call.1} parent=11 // pred_check_branch
          %173 = sbr.rel (%p171) target = $region24
        $region23: #{tpu_custom_call.1} parent=11 // pred_region
          _
        $region24: #{tpu_custom_call.1} parent=11 // pred_fallthru
          _
        // Predicated region
        $region25: #{tpu_custom_call.1} parent=11 // pred_check
          %p174 = pneg %p124
        $region26: #{tpu_custom_call.1} parent=11 // pred_check_branch
          %176 = sbr.rel (%p174) target = $region28
        $region27: #{tpu_custom_call.1} parent=11 // pred_region
          _
        $region28: #{tpu_custom_call.1} parent=11 // pred_fallthru
          _
      $region12: #{tpu_custom_call.1} parent=5 // pred_fallthru
        _
      %p177 = scmp.lt.s32.totalorder %s14, 2
      // Predicated region
      $region29: #{tpu_custom_call.1} parent=5 // pred_check
        %p178 = pneg %p177
      $region30: #{tpu_custom_call.1} parent=5 // pred_check_branch
        %180 = sbr.rel (%p178) target = $region32
      $region31: #{tpu_custom_call.1} parent=5 // pred_region
        // Predicated region
        $region33: #{tpu_custom_call.1} parent=31 // pred_check
          %p181 = pneg %p34
        $region34: #{tpu_custom_call.1} parent=31 // pred_check_branch
          %183 = sbr.rel (%p181) target = $region36
        $region35: #{tpu_custom_call.1} parent=31 // pred_region
          %p184 = scmp.lt.s32.totalorder %s14, 1
          %s185 = scalar_select %p184, %s14, 1
          %s186 = smul.addr %s185, 8
          %s187 = scalar_lea.vmem %s0, %s186
        $region36: #{tpu_custom_call.1} parent=31 // pred_fallthru
          _
      $region32: #{tpu_custom_call.1} parent=5 // pred_fallthru
        _
      %p188 = scmp.le.s32.totalorder 1, %s14
      %p189 = scmp.lt.s32.totalorder %s14, 3
      %p190 = pnand %p188, %p189
      %p191 = pneg %p190
      // Predicated region
      $region37: #{tpu_custom_call.1} parent=5 // pred_check
        _
      $region38: #{tpu_custom_call.1} parent=5 // pred_check_branch
        %193 = sbr.rel (%p190) target = $region40
      $region39: #{tpu_custom_call.1} parent=5 // pred_region
        %s194 = ssub.s32 %s14, 1
        %p195 = scmp.lt.s32.totalorder %s19, 1
        %s196 = scalar_select %p195, %s19, 1
        %s197 = smul.addr %s196, 8
        %s198 = scalar_lea.vmem %s0, %s197
        %p199 = pneg %p40
        %p200 = pneg %p37
        %p201 = pneg %p61
        %p202 = pneg %p58
        %p203 = pneg %p82
        %p204 = pneg %p79
        %p205 = pneg %p103
        %p206 = pneg %p100
        %p207 = pneg %p124
        %p208 = pneg %p121
        %p209 = pneg %p150
        %p210 = pneg %p147
        %s211 = sand.u32 %s137, 1
        %s212 = scalar_lea.sflag [#allocation5], %s211
        %s213 = sand.u32 %s137, 1
        %s214 = smul.addr %s213, 8
        %s215 = scalar_lea.vmem [#allocation4], %s214
        %p216 = scmp.lt.s32.totalorder %s19, 1
        %s217 = scalar_select %p216, %s19, 1
        %s218 = smul.addr %s217, 8
        %s219 = scalar_lea.vmem %s0, %s218
        %v221 = vld [vmem:[%s219] sm:$0xff]
        %v222 = vpack.c.bf16 %v221, %v221
        %v223 = vld [vmem:[%s1] sm:$0xff]
        %v224 = vld [vmem:[%s1 + $0x8] sm:$0xf]
        %v225 = vld [vmem:[%s1 + $0xc] sm:$0xff]
        %v226 = vld [vmem:[%s1 + $0x14] sm:$0xf]
        %v227 = vld [vmem:[%s1 + $0x18] sm:$0xff]
        %v228 = vld [vmem:[%s1 + $0x20] sm:$0xf]
        %v229 = vld [vmem:[%s1 + $0x24] sm:$0xff]
        %v230 = vld [vmem:[%s1 + $0x2c] sm:$0xf]
        %v231 = vld [vmem:[%s2] sm:$0x7]
        %v233 = vlaneseq
        %v234 = vshrl.u32 %v233, 7
        %v235 = vsub.s32 0, %v234
        %v236 = vrot.slane %v231, %v235
        %v237 = vlaneseq
        %v238 = vshrl.u32 %v237, 7
        %v239 = vsub.s32 1, %v238
        %v240 = vrot.slane %v231, %v239
        %v241 = vlaneseq
        %v242 = vshrl.u32 %v241, 7
        %v243 = vsub.s32 2, %v242
        %v244 = vrot.slane %v231, %v243
        %v256 = vunpack.c.l.b16 %v223
        %v257 = vunpack.c.h.b16 %v223
        %v258 = vunpack.c.l.b16 %v224
        %v259 = vunpack.c.l.b16 %v225
        %v260 = vunpack.c.h.b16 %v225
        %v261 = vunpack.c.l.b16 %v226
        %v262 = vunpack.c.l.b16 %v227
        %v263 = vunpack.c.h.b16 %v227
        %v264 = vunpack.c.l.b16 %v228
        %v265 = vunpack.c.l.b16 %v229
        %v266 = vunpack.c.h.b16 %v229
        %v267 = vunpack.c.l.b16 %v230
        %v268 = vpack.c.b16 %v259, %v256
        %v269 = vpack.c.b16 %v260, %v257
        %v270 = vpack.c.b16 %v261, %v258
        %v271 = vpack.c.b16 %v265, %v262
        %v272 = vpack.c.b16 %v266, %v263
        %v273 = vpack.c.b16 %v267, %v264
        %vm280 = vcmask 261120
        %v282 = vsel %vm280, %v222, 0
        %284 = vmatprep.subr.bf16.mxu0 %v269
        %285 = vmatpush1.bf16.msra.mxu0 %v268
        %286 = vmatprep.subr.bf16.mxu0 %v272
        %287 = vmatpush1.bf16.msra.mxu0 %v271
        %288 = vmatprep.subr.bf16.mxu0 0
        %289 = vmatpush1.bf16.msra.mxu0 0
        %290 = vmatprep.subr.bf16.mxu0 0
        %291 = vmatpush1.bf16.msra.mxu0 0
        %292 = vmatprep.subr.bf16.mxu0 0
        %293 = vmatpush1.bf16.msra.mxu0 0
        %294 = vmatprep.subr.bf16.mxu0 0
        %295 = vmatpush1.bf16.msra.mxu0 0
        %296 = vmatprep.subr.bf16.mxu0 0
        %297 = vmatpush1.bf16.msra.mxu0 0
        %298 = vmatprep.subr.bf16.mxu0 0
        %299 = vmatpush1.bf16.msra.mxu0 0
        %300 = vmatprep.subr.bf16.mxu0 0
        %301 = vmatpush1.bf16.msra.mxu0 0
        %302 = vmatprep.subr.bf16.mxu0 0
        %303 = vmatpush1.bf16.msra.mxu0 0
        %304 = vmatprep.subr.bf16.mxu0 0
        %305 = vmatpush1.bf16.msra.mxu0 0
        %306 = vmatprep.subr.bf16.mxu0 0
        %307 = vmatpush1.bf16.msra.mxu0 0
        %308 = vmatprep.subr.bf16.mxu0 0
        %309 = vmatpush1.bf16.msra.mxu0 0
        %310 = vmatprep.subr.bf16.mxu0 0
        %311 = vmatpush1.bf16.msra.mxu0 0
        %312 = vmatprep.subr.bf16.mxu0 0
        %313 = vmatpush1.bf16.msra.mxu0 0
        %314 = vmatprep.subr.bf16.mxu0 0
        %315 = vmatpush1.bf16.msra.mxu0 0
        %316 = vmatprep.mubr.bf16.mxu0 0
        %317 = vmatmul.mubr.bf16.gmra.mrb[0].mxu0 %v282
        %v318 = vpop.f32.mrb[0].mxu0
        %v319 = vadd.f32 %v236, %v318
        %v320 = vpop.f32.mrb[0].mxu0
        %v321 = vadd.f32 %v240, %v320
        %v322 = vpop.f32.mrb[0].mxu0
        %v323 = vpop.f32.mrb[0].mxu0
        %324 = vdwg.mxu0
        %325 = vmatprep.subr.bf16.mxu0 0
        %326 = vmatpush1.bf16.msra.mxu0 %v270
        %327 = vmatprep.subr.bf16.mxu0 0
        %328 = vmatpush1.bf16.msra.mxu0 %v273
        %329 = vmatprep.subr.bf16.mxu0 0
        %330 = vmatpush1.bf16.msra.mxu0 0
        %331 = vmatprep.subr.bf16.mxu0 0
        %332 = vmatpush1.bf16.msra.mxu0 0
        %333 = vmatprep.subr.bf16.mxu0 0
        %334 = vmatpush1.bf16.msra.mxu0 0
        %335 = vmatprep.subr.bf16.mxu0 0
        %336 = vmatpush1.bf16.msra.mxu0 0
        %337 = vmatprep.subr.bf16.mxu0 0
        %338 = vmatpush1.bf16.msra.mxu0 0
        %339 = vmatprep.subr.bf16.mxu0 0
        %340 = vmatpush1.bf16.msra.mxu0 0
        %341 = vmatprep.subr.bf16.mxu0 0
        %342 = vmatpush1.bf16.msra.mxu0 0
        %343 = vmatprep.subr.bf16.mxu0 0
        %344 = vmatpush1.bf16.msra.mxu0 0
        %345 = vmatprep.subr.bf16.mxu0 0
        %346 = vmatpush1.bf16.msra.mxu0 0
        %347 = vmatprep.subr.bf16.mxu0 0
        %348 = vmatpush1.bf16.msra.mxu0 0
        %349 = vmatprep.subr.bf16.mxu0 0
        %350 = vmatpush1.bf16.msra.mxu0 0
        %351 = vmatprep.subr.bf16.mxu0 0
        %352 = vmatpush1.bf16.msra.mxu0 0
        %353 = vmatprep.subr.bf16.mxu0 0
        %354 = vmatpush1.bf16.msra.mxu0 0
        %355 = vmatprep.subr.bf16.mxu0 0
        %356 = vmatpush1.bf16.msra.mxu0 0
        %357 = vmatprep.mubr.bf16.mxu0 0
        %358 = vmatmul.mubr.bf16.gmra.mrb[0].mxu0 %v282
        %v359 = vpop.f32.mrb[0].mxu0
        %v360 = vadd.f32 %v244, %v359
        %v361 = vpop.f32.mrb[0].mxu0
        %v362 = vpop.f32.mrb[0].mxu0
        %v363 = vpop.f32.mrb[0].mxu0
        %364 = vdwg.mxu0
        %365 = vst [vmem:[#allocation2] sm:$0xff] %v319
        %366 = vst [vmem:[#allocation2 + $0x8] sm:$0xff] %v321
        %367 = vst [vmem:[#allocation2 + $0x10] sm:$0xff] %v360
        %v368 = vld [vmem:[#allocation2] sm:$0xff]
        %v369 = vld [vmem:[#allocation2 + $0x8] sm:$0xff]
        %v370 = vld [vmem:[#allocation2 + $0x10] sm:$0xff]
        %v372 = vsel %vm280, %v368, 0
        %v375 = vsel %vm280, %v369, 0
        %377 = vmatprep.subr.mxu0 0.0
        %378 = vmatpush1.xpose.msra.mxu0 %v375
        %379 = vmatprep.subr.mxu0 0.0
        %380 = vmatpush1.xpose.msra.mxu0 0.0
        %381 = vmatprep.subr.mxu0 0.0
        %382 = vmatpush1.xpose.msra.mxu0 0.0
        %383 = vmatprep.subr.mxu0 0.0
        %384 = vmatpush1.xpose.msra.mxu0 0.0
        %385 = vmatprep.subr.mxu0 0.0
        %386 = vmatpush1.xpose.msra.mxu0 0.0
        %387 = vmatprep.subr.mxu0 0.0
        %388 = vmatpush1.xpose.msra.mxu0 0.0
        %389 = vmatprep.subr.mxu0 0.0
        %390 = vmatpush1.xpose.msra.mxu0 0.0
        %391 = vmatprep.subr.mxu0 0.0
        %392 = vmatpush1.xpose.msra.mxu0 0.0
        %393 = vmatprep.subr.mxu0 0.0
        %394 = vmatpush1.xpose.msra.mxu0 0.0
        %395 = vmatprep.subr.mxu0 0.0
        %396 = vmatpush1.xpose.msra.mxu0 0.0
        %397 = vmatprep.subr.mxu0 0.0
        %398 = vmatpush1.xpose.msra.mxu0 0.0
        %399 = vmatprep.subr.mxu0 0.0
        %400 = vmatpush1.xpose.msra.mxu0 0.0
        %401 = vmatprep.subr.mxu0 0.0
        %402 = vmatpush1.xpose.msra.mxu0 0.0
        %403 = vmatprep.subr.mxu0 0.0
        %404 = vmatpush1.xpose.msra.mxu0 0.0
        %405 = vmatprep.subr.mxu0 0.0
        %406 = vmatpush1.xpose.msra.mxu0 0.0
        %407 = vmatprep.subr.mxu0 0.0
        %408 = vmatpush1.xpose.msra.mxu0 0.0
        %409 = vmatprep.subr.mxu0 0.0
        %410 = vmatpush1.xpose.msra.mxu0 0.0
        %411 = vmatprep.subr.mxu0 0.0
        %412 = vmatpush1.xpose.msra.mxu0 0.0
        %413 = vmatprep.subr.mxu0 0.0
        %414 = vmatpush1.xpose.msra.mxu0 0.0
        %415 = vmatprep.subr.mxu0 0.0
        %416 = vmatpush1.xpose.msra.mxu0 0.0
        %417 = vmatprep.subr.mxu0 0.0
        %418 = vmatpush1.xpose.msra.mxu0 0.0
        %419 = vmatprep.subr.mxu0 0.0
        %420 = vmatpush1.xpose.msra.mxu0 0.0
        %421 = vmatprep.subr.mxu0 0.0
        %422 = vmatpush1.xpose.msra.mxu0 0.0
        %423 = vmatprep.subr.mxu0 0.0
        %424 = vmatpush1.xpose.msra.mxu0 0.0
        %425 = vmatprep.subr.mxu0 0.0
        %426 = vmatpush1.xpose.msra.mxu0 0.0
        %427 = vmatprep.subr.mxu0 0.0
        %428 = vmatpush1.xpose.msra.mxu0 0.0
        %429 = vmatprep.subr.mxu0 0.0
        %430 = vmatpush1.xpose.msra.mxu0 0.0
        %431 = vmatprep.subr.mxu0 0.0
        %432 = vmatpush1.xpose.msra.mxu0 0.0
        %433 = vmatprep.subr.mxu0 0.0
        %434 = vmatpush1.xpose.msra.mxu0 0.0
        %435 = vmatprep.subr.mxu0 0.0
        %436 = vmatpush1.xpose.msra.mxu0 0.0
        %437 = vmatprep.subr.mxu0 0.0
        %438 = vmatpush1.xpose.msra.mxu0 0.0
        %439 = vmatprep.subr.mxu0 0.0
        %440 = vmatpush1.xpose.msra.mxu0 0.0
        %441 = vmatprep.mubr.f32.mxu0 0.0
        %442 = vmatmul.mubr.f32.gmra.mrb[0].mxu0 %v372
        %v443 = vpop.f32.mrb[0].mxu0
        %v444 = vadd.f32 0.0, %v443
        %v445 = vpop.f32.mrb[0].mxu0
        %446 = vdwg.mxu0
        %vm447 = vcmask 64512
        %v448 = vsel %vm447, %v444, -inf
        %v449 = vrot.slane %v448, 4
        %v450 = vmax.f32 %v448, %v449
        %v451 = vrot.slane %v450, 2
        %v452 = vmax.f32 %v450, %v451
        %v453 = vrot.slane %v452, 1
        %v454 = vmax.f32 %v452, %v453
        %v455 = vsub.f32 %v444, %v454
        %v456 = vmul.f32 %v455, 1.442695
        %v457 = vpow.pop %v456
        %v458 = vsel %vm447, %v457, 0.0
        %v459 = vrot.slane %v458, 4
        %v460 = vadd.f32 %v458, %v459
        %v461 = vrot.slane %v460, 2
        %v462 = vadd.f32 %v460, %v461
        %v463 = vrot.slane %v462, 1
        %v464 = vadd.f32 %v462, %v463
        %v465 = vrcp.pop %v464
        %v466 = vmul.f32 %v457, %v465
        %v468 = vsel %vm447, %v466, 0
        %470 = vmatprep.subr.mxu0 0.0
        %471 = vmatpush1.msra.mxu0 %v370
        %472 = vmatprep.subr.mxu0 0.0
        %473 = vmatpush1.msra.mxu0 0.0
        %474 = vmatprep.subr.mxu0 0.0
        %475 = vmatpush1.msra.mxu0 0.0
        %476 = vmatprep.subr.mxu0 0.0
        %477 = vmatpush1.msra.mxu0 0.0
        %478 = vmatprep.subr.mxu0 0.0
        %479 = vmatpush1.msra.mxu0 0.0
        %480 = vmatprep.subr.mxu0 0.0
        %481 = vmatpush1.msra.mxu0 0.0
        %482 = vmatprep.subr.mxu0 0.0
        %483 = vmatpush1.msra.mxu0 0.0
        %484 = vmatprep.subr.mxu0 0.0
        %485 = vmatpush1.msra.mxu0 0.0
        %486 = vmatprep.subr.mxu0 0.0
        %487 = vmatpush1.msra.mxu0 0.0
        %488 = vmatprep.subr.mxu0 0.0
        %489 = vmatpush1.msra.mxu0 0.0
        %490 = vmatprep.subr.mxu0 0.0
        %491 = vmatpush1.msra.mxu0 0.0
        %492 = vmatprep.subr.mxu0 0.0
        %493 = vmatpush1.msra.mxu0 0.0
        %494 = vmatprep.subr.mxu0 0.0
        %495 = vmatpush1.msra.mxu0 0.0
        %496 = vmatprep.subr.mxu0 0.0
        %497 = vmatpush1.msra.mxu0 0.0
        %498 = vmatprep.subr.mxu0 0.0
        %499 = vmatpush1.msra.mxu0 0.0
        %500 = vmatprep.subr.mxu0 0.0
        %501 = vmatpush1.msra.mxu0 0.0
        %502 = vmatprep.subr.mxu0 0.0
        %503 = vmatpush1.msra.mxu0 0.0
        %504 = vmatprep.subr.mxu0 0.0
        %505 = vmatpush1.msra.mxu0 0.0
        %506 = vmatprep.subr.mxu0 0.0
        %507 = vmatpush1.msra.mxu0 0.0
        %508 = vmatprep.subr.mxu0 0.0
        %509 = vmatpush1.msra.mxu0 0.0
        %510 = vmatprep.subr.mxu0 0.0
        %511 = vmatpush1.msra.mxu0 0.0
        %512 = vmatprep.subr.mxu0 0.0
        %513 = vmatpush1.msra.mxu0 0.0
        %514 = vmatprep.subr.mxu0 0.0
        %515 = vmatpush1.msra.mxu0 0.0
        %516 = vmatprep.subr.mxu0 0.0
        %517 = vmatpush1.msra.mxu0 0.0
        %518 = vmatprep.subr.mxu0 0.0
        %519 = vmatpush1.msra.mxu0 0.0
        %520 = vmatprep.subr.mxu0 0.0
        %521 = vmatpush1.msra.mxu0 0.0
        %522 = vmatprep.subr.mxu0 0.0
        %523 = vmatpush1.msra.mxu0 0.0
        %524 = vmatprep.subr.mxu0 0.0
        %525 = vmatpush1.msra.mxu0 0.0
        %526 = vmatprep.subr.mxu0 0.0
        %527 = vmatpush1.msra.mxu0 0.0
        %528 = vmatprep.subr.mxu0 0.0
        %529 = vmatpush1.msra.mxu0 0.0
        %530 = vmatprep.subr.mxu0 0.0
        %531 = vmatpush1.msra.mxu0 0.0
        %532 = vmatprep.subr.mxu0 0.0
        %533 = vmatpush1.msra.mxu0 0.0
        %534 = vmatprep.mubr.f32.mxu0 0.0
        %535 = vmatmul.mubr.f32.gmra.mrb[0].mxu0 %v468
        %v536 = vpop.f32.mrb[0].mxu0
        %v537 = vadd.f32 0.0, %v536
        %v538 = vpop.f32.mrb[0].mxu0
        %539 = vdwg.mxu0
        %540 = vst.msk [vmem:[#allocation3] sm:$0xff] %vm280, %v537
        %v541 = vld [vmem:[#allocation2] sm:$0xff]
        %v542 = vld [vmem:[#allocation2 + $0x8] sm:$0xff]
        %v543 = vld [vmem:[#allocation2 + $0x10] sm:$0xff]
        %545 = vrot.lane.b32.xlu0 %v541, 96
        %v546 = vpop.permute.xlu0 %545
        %548 = vrot.lane.b32.xlu0 %v542, 96
        %v549 = vpop.permute.xlu0 %548
        %v550 = vsel %vm280, %v546, 0
        %v552 = vsel %vm280, %v549, 0
        %554 = vmatprep.subr.mxu0 0.0
        %555 = vmatpush1.xpose.msra.mxu0 %v552
        %556 = vmatprep.subr.mxu0 0.0
        %557 = vmatpush1.xpose.msra.mxu0 0.0
        %558 = vmatprep.subr.mxu0 0.0
        %559 = vmatpush1.xpose.msra.mxu0 0.0
        %560 = vmatprep.subr.mxu0 0.0
        %561 = vmatpush1.xpose.msra.mxu0 0.0
        %562 = vmatprep.subr.mxu0 0.0
        %563 = vmatpush1.xpose.msra.mxu0 0.0
        %564 = vmatprep.subr.mxu0 0.0
        %565 = vmatpush1.xpose.msra.mxu0 0.0
        %566 = vmatprep.subr.mxu0 0.0
        %567 = vmatpush1.xpose.msra.mxu0 0.0
        %568 = vmatprep.subr.mxu0 0.0
        %569 = vmatpush1.xpose.msra.mxu0 0.0
        %570 = vmatprep.subr.mxu0 0.0
        %571 = vmatpush1.xpose.msra.mxu0 0.0
        %572 = vmatprep.subr.mxu0 0.0
        %573 = vmatpush1.xpose.msra.mxu0 0.0
        %574 = vmatprep.subr.mxu0 0.0
        %575 = vmatpush1.xpose.msra.mxu0 0.0
        %576 = vmatprep.subr.mxu0 0.0
        %577 = vmatpush1.xpose.msra.mxu0 0.0
        %578 = vmatprep.subr.mxu0 0.0
        %579 = vmatpush1.xpose.msra.mxu0 0.0
        %580 = vmatprep.subr.mxu0 0.0
        %581 = vmatpush1.xpose.msra.mxu0 0.0
        %582 = vmatprep.subr.mxu0 0.0
        %583 = vmatpush1.xpose.msra.mxu0 0.0
        %584 = vmatprep.subr.mxu0 0.0
        %585 = vmatpush1.xpose.msra.mxu0 0.0
        %586 = vmatprep.subr.mxu0 0.0
        %587 = vmatpush1.xpose.msra.mxu0 0.0
        %588 = vmatprep.subr.mxu0 0.0
        %589 = vmatpush1.xpose.msra.mxu0 0.0
        %590 = vmatprep.subr.mxu0 0.0
        %591 = vmatpush1.xpose.msra.mxu0 0.0
        %592 = vmatprep.subr.mxu0 0.0
        %593 = vmatpush1.xpose.msra.mxu0 0.0
        %594 = vmatprep.subr.mxu0 0.0
        %595 = vmatpush1.xpose.msra.mxu0 0.0
        %596 = vmatprep.subr.mxu0 0.0
        %597 = vmatpush1.xpose.msra.mxu0 0.0
        %598 = vmatprep.subr.mxu0 0.0
        %599 = vmatpush1.xpose.msra.mxu0 0.0
        %600 = vmatprep.subr.mxu0 0.0
        %601 = vmatpush1.xpose.msra.mxu0 0.0
        %602 = vmatprep.subr.mxu0 0.0
        %603 = vmatpush1.xpose.msra.mxu0 0.0
        %604 = vmatprep.subr.mxu0 0.0
        %605 = vmatpush1.xpose.msra.mxu0 0.0
        %606 = vmatprep.subr.mxu0 0.0
        %607 = vmatpush1.xpose.msra.mxu0 0.0
        %608 = vmatprep.subr.mxu0 0.0
        %609 = vmatpush1.xpose.msra.mxu0 0.0
        %610 = vmatprep.subr.mxu0 0.0
        %611 = vmatpush1.xpose.msra.mxu0 0.0
        %612 = vmatprep.subr.mxu0 0.0
        %613 = vmatpush1.xpose.msra.mxu0 0.0
        %614 = vmatprep.subr.mxu0 0.0
        %615 = vmatpush1.xpose.msra.mxu0 0.0
        %616 = vmatprep.subr.mxu0 0.0
        %617 = vmatpush1.xpose.msra.mxu0 0.0
        %618 = vmatprep.mubr.f32.mxu0 0.0
        %619 = vmatmul.mubr.f32.gmra.mrb[0].mxu0 %v550
        %v620 = vpop.f32.mrb[0].mxu0
        %v621 = vadd.f32 0.0, %v620
        %v622 = vpop.f32.mrb[0].mxu0
        %623 = vdwg.mxu0
        %v624 = vsel %vm447, %v621, -inf
        %v625 = vrot.slane %v624, 4
        %v626 = vmax.f32 %v624, %v625
        %v627 = vrot.slane %v626, 2
        %v628 = vmax.f32 %v626, %v627
        %v629 = vrot.slane %v628, 1
        %v630 = vmax.f32 %v628, %v629
        %v631 = vsub.f32 %v621, %v630
        %v632 = vmul.f32 %v631, 1.442695
        %v633 = vpow.pop %v632
        %v634 = vsel %vm447, %v633, 0.0
        %v635 = vrot.slane %v634, 4
        %v636 = vadd.f32 %v634, %v635
        %v637 = vrot.slane %v636, 2
        %v638 = vadd.f32 %v636, %v637
        %v639 = vrot.slane %v638, 1
        %v640 = vadd.f32 %v638, %v639
        %v641 = vrcp.pop %v640
        %v642 = vmul.f32 %v633, %v641
        %644 = vrot.lane.b32.xlu0 %v543, 96
        %v645 = vpop.permute.xlu0 %644
        %v648 = vsel %vm447, %v642, 0
        %650 = vmatprep.subr.mxu0 0.0
        %651 = vmatpush1.msra.mxu0 %v645
        %652 = vmatprep.subr.mxu0 0.0
        %653 = vmatpush1.msra.mxu0 0.0
        %654 = vmatprep.subr.mxu0 0.0
        %655 = vmatpush1.msra.mxu0 0.0
        %656 = vmatprep.subr.mxu0 0.0
        %657 = vmatpush1.msra.mxu0 0.0
        %658 = vmatprep.subr.mxu0 0.0
        %659 = vmatpush1.msra.mxu0 0.0
        %660 = vmatprep.subr.mxu0 0.0
        %661 = vmatpush1.msra.mxu0 0.0
        %662 = vmatprep.subr.mxu0 0.0
        %663 = vmatpush1.msra.mxu0 0.0
        %664 = vmatprep.subr.mxu0 0.0
        %665 = vmatpush1.msra.mxu0 0.0
        %666 = vmatprep.subr.mxu0 0.0
        %667 = vmatpush1.msra.mxu0 0.0
        %668 = vmatprep.subr.mxu0 0.0
        %669 = vmatpush1.msra.mxu0 0.0
        %670 = vmatprep.subr.mxu0 0.0
        %671 = vmatpush1.msra.mxu0 0.0
        %672 = vmatprep.subr.mxu0 0.0
        %673 = vmatpush1.msra.mxu0 0.0
        %674 = vmatprep.subr.mxu0 0.0
        %675 = vmatpush1.msra.mxu0 0.0
        %676 = vmatprep.subr.mxu0 0.0
        %677 = vmatpush1.msra.mxu0 0.0
        %678 = vmatprep.subr.mxu0 0.0
        %679 = vmatpush1.msra.mxu0 0.0
        %680 = vmatprep.subr.mxu0 0.0
        %681 = vmatpush1.msra.mxu0 0.0
        %682 = vmatprep.subr.mxu0 0.0
        %683 = vmatpush1.msra.mxu0 0.0
        %684 = vmatprep.subr.mxu0 0.0
        %685 = vmatpush1.msra.mxu0 0.0
        %686 = vmatprep.subr.mxu0 0.0
        %687 = vmatpush1.msra.mxu0 0.0
        %688 = vmatprep.subr.mxu0 0.0
        %689 = vmatpush1.msra.mxu0 0.0
        %690 = vmatprep.subr.mxu0 0.0
        %691 = vmatpush1.msra.mxu0 0.0
        %692 = vmatprep.subr.mxu0 0.0
        %693 = vmatpush1.msra.mxu0 0.0
        %694 = vmatprep.subr.mxu0 0.0
        %695 = vmatpush1.msra.mxu0 0.0
        %696 = vmatprep.subr.mxu0 0.0
        %697 = vmatpush1.msra.mxu0 0.0
        %698 = vmatprep.subr.mxu0 0.0
        %699 = vmatpush1.msra.mxu0 0.0
        %700 = vmatprep.subr.mxu0 0.0
        %701 = vmatpush1.msra.mxu0 0.0
        %702 = vmatprep.subr.mxu0 0.0
        %703 = vmatpush1.msra.mxu0 0.0
        %704 = vmatprep.subr.mxu0 0.0
        %705 = vmatpush1.msra.mxu0 0.0
        %706 = vmatprep.subr.mxu0 0.0
        %707 = vmatpush1.msra.mxu0 0.0
        %708 = vmatprep.subr.mxu0 0.0
        %709 = vmatpush1.msra.mxu0 0.0
        %710 = vmatprep.subr.mxu0 0.0
        %711 = vmatpush1.msra.mxu0 0.0
        %712 = vmatprep.subr.mxu0 0.0
        %713 = vmatpush1.msra.mxu0 0.0
        %714 = vmatprep.mubr.f32.mxu0 0.0
        %715 = vmatmul.mubr.f32.gmra.mrb[0].mxu0 %v648
        %v716 = vpop.f32.mrb[0].mxu0
        %v717 = vadd.f32 0.0, %v716
        %v718 = vpop.f32.mrb[0].mxu0
        %719 = vdwg.mxu0
        %721 = vrot.lane.b32.xlu0 %v717, 32
        %v722 = vpop.permute.xlu0 %721
        %vm724 = vcmask 523520
        %725 = vst.msk [vmem:[#allocation3] sm:$0xff] %vm724, %v722
        %v726 = vld [vmem:[#allocation2] sm:$0xff]
        %v727 = vld [vmem:[#allocation2 + $0x8] sm:$0xff]
        %v728 = vld [vmem:[#allocation2 + $0x10] sm:$0xff]
        %730 = vrot.lane.b32.xlu0 %v726, 64
        %v731 = vpop.permute.xlu0 %730
        %733 = vrot.lane.b32.xlu0 %v727, 64
        %v734 = vpop.permute.xlu0 %733
        %v735 = vsel %vm280, %v731, 0
        %v737 = vsel %vm280, %v734, 0
        %739 = vmatprep.subr.mxu0 0.0
        %740 = vmatpush1.xpose.msra.mxu0 %v737
        %741 = vmatprep.subr.mxu0 0.0
        %742 = vmatpush1.xpose.msra.mxu0 0.0
        %743 = vmatprep.subr.mxu0 0.0
        %744 = vmatpush1.xpose.msra.mxu0 0.0
        %745 = vmatprep.subr.mxu0 0.0
        %746 = vmatpush1.xpose.msra.mxu0 0.0
        %747 = vmatprep.subr.mxu0 0.0
        %748 = vmatpush1.xpose.msra.mxu0 0.0
        %749 = vmatprep.subr.mxu0 0.0
        %750 = vmatpush1.xpose.msra.mxu0 0.0
        %751 = vmatprep.subr.mxu0 0.0
        %752 = vmatpush1.xpose.msra.mxu0 0.0
        %753 = vmatprep.subr.mxu0 0.0
        %754 = vmatpush1.xpose.msra.mxu0 0.0
        %755 = vmatprep.subr.mxu0 0.0
        %756 = vmatpush1.xpose.msra.mxu0 0.0
        %757 = vmatprep.subr.mxu0 0.0
        %758 = vmatpush1.xpose.msra.mxu0 0.0
        %759 = vmatprep.subr.mxu0 0.0
        %760 = vmatpush1.xpose.msra.mxu0 0.0
        %761 = vmatprep.subr.mxu0 0.0
        %762 = vmatpush1.xpose.msra.mxu0 0.0
        %763 = vmatprep.subr.mxu0 0.0
        %764 = vmatpush1.xpose.msra.mxu0 0.0
        %765 = vmatprep.subr.mxu0 0.0
        %766 = vmatpush1.xpose.msra.mxu0 0.0
        %767 = vmatprep.subr.mxu0 0.0
        %768 = vmatpush1.xpose.msra.mxu0 0.0
        %769 = vmatprep.subr.mxu0 0.0
        %770 = vmatpush1.xpose.msra.mxu0 0.0
        %771 = vmatprep.subr.mxu0 0.0
        %772 = vmatpush1.xpose.msra.mxu0 0.0
        %773 = vmatprep.subr.mxu0 0.0
        %774 = vmatpush1.xpose.msra.mxu0 0.0
        %775 = vmatprep.subr.mxu0 0.0
        %776 = vmatpush1.xpose.msra.mxu0 0.0
        %777 = vmatprep.subr.mxu0 0.0
        %778 = vmatpush1.xpose.msra.mxu0 0.0
        %779 = vmatprep.subr.mxu0 0.0
        %780 = vmatpush1.xpose.msra.mxu0 0.0
        %781 = vmatprep.subr.mxu0 0.0
        %782 = vmatpush1.xpose.msra.mxu0 0.0
        %783 = vmatprep.subr.mxu0 0.0
        %784 = vmatpush1.xpose.msra.mxu0 0.0
        %785 = vmatprep.subr.mxu0 0.0
        %786 = vmatpush1.xpose.msra.mxu0 0.0
        %787 = vmatprep.subr.mxu0 0.0
        %788 = vmatpush1.xpose.msra.mxu0 0.0
        %789 = vmatprep.subr.mxu0 0.0
        %790 = vmatpush1.xpose.msra.mxu0 0.0
        %791 = vmatprep.subr.mxu0 0.0
        %792 = vmatpush1.xpose.msra.mxu0 0.0
        %793 = vmatprep.subr.mxu0 0.0
        %794 = vmatpush1.xpose.msra.mxu0 0.0
        %795 = vmatprep.subr.mxu0 0.0
        %796 = vmatpush1.xpose.msra.mxu0 0.0
        %797 = vmatprep.subr.mxu0 0.0
        %798 = vmatpush1.xpose.msra.mxu0 0.0
        %799 = vmatprep.subr.mxu0 0.0
        %800 = vmatpush1.xpose.msra.mxu0 0.0
        %801 = vmatprep.subr.mxu0 0.0
        %802 = vmatpush1.xpose.msra.mxu0 0.0
        %803 = vmatprep.mubr.f32.mxu0 0.0
        %804 = vmatmul.mubr.f32.gmra.mrb[0].mxu0 %v735
        %v805 = vpop.f32.mrb[0].mxu0
        %v806 = vadd.f32 0.0, %v805
        %v807 = vpop.f32.mrb[0].mxu0
        %808 = vdwg.mxu0
        %v809 = vsel %vm447, %v806, -inf
        %v810 = vrot.slane %v809, 4
        %v811 = vmax.f32 %v809, %v810
        %v812 = vrot.slane %v811, 2
        %v813 = vmax.f32 %v811, %v812
        %v814 = vrot.slane %v813, 1
        %v815 = vmax.f32 %v813, %v814
        %v816 = vsub.f32 %v806, %v815
        %v817 = vmul.f32 %v816, 1.442695
        %v818 = vpow.pop %v817
        %v819 = vsel %vm447, %v818, 0.0
        %v820 = vrot.slane %v819, 4
        %v821 = vadd.f32 %v819, %v820
        %v822 = vrot.slane %v821, 2
        %v823 = vadd.f32 %v821, %v822
        %v824 = vrot.slane %v823, 1
        %v825 = vadd.f32 %v823, %v824
        %v826 = vrcp.pop %v825
        %v827 = vmul.f32 %v818, %v826
        %829 = vrot.lane.b32.xlu0 %v728, 64
        %v830 = vpop.permute.xlu0 %829
        %v833 = vsel %vm447, %v827, 0
        %835 = vmatprep.subr.mxu0 0.0
        %836 = vmatpush1.msra.mxu0 %v830
        %837 = vmatprep.subr.mxu0 0.0
        %838 = vmatpush1.msra.mxu0 0.0
        %839 = vmatprep.subr.mxu0 0.0
        %840 = vmatpush1.msra.mxu0 0.0
        %841 = vmatprep.subr.mxu0 0.0
        %842 = vmatpush1.msra.mxu0 0.0
        %843 = vmatprep.subr.mxu0 0.0
        %844 = vmatpush1.msra.mxu0 0.0
        %845 = vmatprep.subr.mxu0 0.0
        %846 = vmatpush1.msra.mxu0 0.0
        %847 = vmatprep.subr.mxu0 0.0
        %848 = vmatpush1.msra.mxu0 0.0
        %849 = vmatprep.subr.mxu0 0.0
        %850 = vmatpush1.msra.mxu0 0.0
        %851 = vmatprep.subr.mxu0 0.0
        %852 = vmatpush1.msra.mxu0 0.0
        %853 = vmatprep.subr.mxu0 0.0
        %854 = vmatpush1.msra.mxu0 0.0
        %855 = vmatprep.subr.mxu0 0.0
        %856 = vmatpush1.msra.mxu0 0.0
        %857 = vmatprep.subr.mxu0 0.0
        %858 = vmatpush1.msra.mxu0 0.0
        %859 = vmatprep.subr.mxu0 0.0
        %860 = vmatpush1.msra.mxu0 0.0
        %861 = vmatprep.subr.mxu0 0.0
        %862 = vmatpush1.msra.mxu0 0.0
        %863 = vmatprep.subr.mxu0 0.0
        %864 = vmatpush1.msra.mxu0 0.0
        %865 = vmatprep.subr.mxu0 0.0
        %866 = vmatpush1.msra.mxu0 0.0
        %867 = vmatprep.subr.mxu0 0.0
        %868 = vmatpush1.msra.mxu0 0.0
        %869 = vmatprep.subr.mxu0 0.0
        %870 = vmatpush1.msra.mxu0 0.0
        %871 = vmatprep.subr.mxu0 0.0
        %872 = vmatpush1.msra.mxu0 0.0
        %873 = vmatprep.subr.mxu0 0.0
        %874 = vmatpush1.msra.mxu0 0.0
        %875 = vmatprep.subr.mxu0 0.0
        %876 = vmatpush1.msra.mxu0 0.0
        %877 = vmatprep.subr.mxu0 0.0
        %878 = vmatpush1.msra.mxu0 0.0
        %879 = vmatprep.subr.mxu0 0.0
        %880 = vmatpush1.msra.mxu0 0.0
        %881 = vmatprep.subr.mxu0 0.0
        %882 = vmatpush1.msra.mxu0 0.0
        %883 = vmatprep.subr.mxu0 0.0
        %884 = vmatpush1.msra.mxu0 0.0
        %885 = vmatprep.subr.mxu0 0.0
        %886 = vmatpush1.msra.mxu0 0.0
        %887 = vmatprep.subr.mxu0 0.0
        %888 = vmatpush1.msra.mxu0 0.0
        %889 = vmatprep.subr.mxu0 0.0
        %890 = vmatpush1.msra.mxu0 0.0
        %891 = vmatprep.subr.mxu0 0.0
        %892 = vmatpush1.msra.mxu0 0.0
        %893 = vmatprep.subr.mxu0 0.0
        %894 = vmatpush1.msra.mxu0 0.0
        %895 = vmatprep.subr.mxu0 0.0
        %896 = vmatpush1.msra.mxu0 0.0
        %897 = vmatprep.subr.mxu0 0.0
        %898 = vmatpush1.msra.mxu0 0.0
        %899 = vmatprep.mubr.f32.mxu0 0.0
        %900 = vmatmul.mubr.f32.gmra.mrb[0].mxu0 %v833
        %v901 = vpop.f32.mrb[0].mxu0
        %v902 = vadd.f32 0.0, %v901
        %v903 = vpop.f32.mrb[0].mxu0
        %904 = vdwg.mxu0
        %906 = vrot.lane.b32.xlu0 %v902, 64
        %v907 = vpop.permute.xlu0 %906
        %vm909 = vcmask 785920
        %910 = vst.msk [vmem:[#allocation3] sm:$0xff] %vm909, %v907
        %v911 = vld [vmem:[#allocation2] sm:$0xff]
        %v912 = vld [vmem:[#allocation2 + $0x8] sm:$0xff]
        %v913 = vld [vmem:[#allocation2 + $0x10] sm:$0xff]
        %915 = vrot.lane.b32.xlu0 %v911, 32
        %v916 = vpop.permute.xlu0 %915
        %918 = vrot.lane.b32.xlu0 %v912, 32
        %v919 = vpop.permute.xlu0 %918
        %v920 = vsel %vm280, %v916, 0
        %v922 = vsel %vm280, %v919, 0
        %924 = vmatprep.subr.mxu0 0.0
        %925 = vmatpush1.xpose.msra.mxu0 %v922
        %926 = vmatprep.subr.mxu0 0.0
        %927 = vmatpush1.xpose.msra.mxu0 0.0
        %928 = vmatprep.subr.mxu0 0.0
        %929 = vmatpush1.xpose.msra.mxu0 0.0
        %930 = vmatprep.subr.mxu0 0.0
        %931 = vmatpush1.xpose.msra.mxu0 0.0
        %932 = vmatprep.subr.mxu0 0.0
        %933 = vmatpush1.xpose.msra.mxu0 0.0
        %934 = vmatprep.subr.mxu0 0.0
        %935 = vmatpush1.xpose.msra.mxu0 0.0
        %936 = vmatprep.subr.mxu0 0.0
        %937 = vmatpush1.xpose.msra.mxu0 0.0
        %938 = vmatprep.subr.mxu0 0.0
        %939 = vmatpush1.xpose.msra.mxu0 0.0
        %940 = vmatprep.subr.mxu0 0.0
        %941 = vmatpush1.xpose.msra.mxu0 0.0
        %942 = vmatprep.subr.mxu0 0.0
        %943 = vmatpush1.xpose.msra.mxu0 0.0
        %944 = vmatprep.subr.mxu0 0.0
        %945 = vmatpush1.xpose.msra.mxu0 0.0
        %946 = vmatprep.subr.mxu0 0.0
        %947 = vmatpush1.xpose.msra.mxu0 0.0
        %948 = vmatprep.subr.mxu0 0.0
        %949 = vmatpush1.xpose.msra.mxu0 0.0
        %950 = vmatprep.subr.mxu0 0.0
        %951 = vmatpush1.xpose.msra.mxu0 0.0
        %952 = vmatprep.subr.mxu0 0.0
        %953 = vmatpush1.xpose.msra.mxu0 0.0
        %954 = vmatprep.subr.mxu0 0.0
        %955 = vmatpush1.xpose.msra.mxu0 0.0
        %956 = vmatprep.subr.mxu0 0.0
        %957 = vmatpush1.xpose.msra.mxu0 0.0
        %958 = vmatprep.subr.mxu0 0.0
        %959 = vmatpush1.xpose.msra.mxu0 0.0
        %960 = vmatprep.subr.mxu0 0.0
        %961 = vmatpush1.xpose.msra.mxu0 0.0
        %962 = vmatprep.subr.mxu0 0.0
        %963 = vmatpush1.xpose.msra.mxu0 0.0
        %964 = vmatprep.subr.mxu0 0.0
        %965 = vmatpush1.xpose.msra.mxu0 0.0
        %966 = vmatprep.subr.mxu0 0.0
        %967 = vmatpush1.xpose.msra.mxu0 0.0
        %968 = vmatprep.subr.mxu0 0.0
        %969 = vmatpush1.xpose.msra.mxu0 0.0
        %970 = vmatprep.subr.mxu0 0.0
        %971 = vmatpush1.xpose.msra.mxu0 0.0
        %972 = vmatprep.subr.mxu0 0.0
        %973 = vmatpush1.xpose.msra.mxu0 0.0
        %974 = vmatprep.subr.mxu0 0.0
        %975 = vmatpush1.xpose.msra.mxu0 0.0
        %976 = vmatprep.subr.mxu0 0.0
        %977 = vmatpush1.xpose.msra.mxu0 0.0
        %978 = vmatprep.subr.mxu0 0.0
        %979 = vmatpush1.xpose.msra.mxu0 0.0
        %980 = vmatprep.subr.mxu0 0.0
        %981 = vmatpush1.xpose.msra.mxu0 0.0
        %982 = vmatprep.subr.mxu0 0.0
        %983 = vmatpush1.xpose.msra.mxu0 0.0
        %984 = vmatprep.subr.mxu0 0.0
        %985 = vmatpush1.xpose.msra.mxu0 0.0
        %986 = vmatprep.subr.mxu0 0.0
        %987 = vmatpush1.xpose.msra.mxu0 0.0
        %988 = vmatprep.mubr.f32.mxu0 0.0
        %989 = vmatmul.mubr.f32.gmra.mrb[0].mxu0 %v920
        %v990 = vpop.f32.mrb[0].mxu0
        %v991 = vadd.f32 0.0, %v990
        %v992 = vpop.f32.mrb[0].mxu0
        %993 = vdwg.mxu0
        %v994 = vsel %vm447, %v991, -inf
        %v995 = vrot.slane %v994, 4
        %v996 = vmax.f32 %v994, %v995
        %v997 = vrot.slane %v996, 2
        %v998 = vmax.f32 %v996, %v997
        %v999 = vrot.slane %v998, 1
        %v1000 = vmax.f32 %v998, %v999
        %v1001 = vsub.f32 %v991, %v1000
        %v1002 = vmul.f32 %v1001, 1.442695
        %v1003 = vpow.pop %v1002
        %v1004 = vsel %vm447, %v1003, 0.0
        %v1005 = vrot.slane %v1004, 4
        %v1006 = vadd.f32 %v1004, %v1005
        %v1007 = vrot.slane %v1006, 2
        %v1008 = vadd.f32 %v1006, %v1007
        %v1009 = vrot.slane %v1008, 1
        %v1010 = vadd.f32 %v1008, %v1009
        %v1011 = vrcp.pop %v1010
        %v1012 = vmul.f32 %v1003, %v1011
        %1014 = vrot.lane.b32.xlu0 %v913, 32
        %v1015 = vpop.permute.xlu0 %1014
        %v1018 = vsel %vm447, %v1012, 0
        %1020 = vmatprep.subr.mxu0 0.0
        %1021 = vmatpush1.msra.mxu0 %v1015
        %1022 = vmatprep.subr.mxu0 0.0
        %1023 = vmatpush1.msra.mxu0 0.0
        %1024 = vmatprep.subr.mxu0 0.0
        %1025 = vmatpush1.msra.mxu0 0.0
        %1026 = vmatprep.subr.mxu0 0.0
        %1027 = vmatpush1.msra.mxu0 0.0
        %1028 = vmatprep.subr.mxu0 0.0
        %1029 = vmatpush1.msra.mxu0 0.0
        %1030 = vmatprep.subr.mxu0 0.0
        %1031 = vmatpush1.msra.mxu0 0.0
        %1032 = vmatprep.subr.mxu0 0.0
        %1033 = vmatpush1.msra.mxu0 0.0
        %1034 = vmatprep.subr.mxu0 0.0
        %1035 = vmatpush1.msra.mxu0 0.0
        %1036 = vmatprep.subr.mxu0 0.0
        %1037 = vmatpush1.msra.mxu0 0.0
        %1038 = vmatprep.subr.mxu0 0.0
        %1039 = vmatpush1.msra.mxu0 0.0
        %1040 = vmatprep.subr.mxu0 0.0
        %1041 = vmatpush1.msra.mxu0 0.0
        %1042 = vmatprep.subr.mxu0 0.0
        %1043 = vmatpush1.msra.mxu0 0.0
        %1044 = vmatprep.subr.mxu0 0.0
        %1045 = vmatpush1.msra.mxu0 0.0
        %1046 = vmatprep.subr.mxu0 0.0
        %1047 = vmatpush1.msra.mxu0 0.0
        %1048 = vmatprep.subr.mxu0 0.0
        %1049 = vmatpush1.msra.mxu0 0.0
        %1050 = vmatprep.subr.mxu0 0.0
        %1051 = vmatpush1.msra.mxu0 0.0
        %1052 = vmatprep.subr.mxu0 0.0
        %1053 = vmatpush1.msra.mxu0 0.0
        %1054 = vmatprep.subr.mxu0 0.0
        %1055 = vmatpush1.msra.mxu0 0.0
        %1056 = vmatprep.subr.mxu0 0.0
        %1057 = vmatpush1.msra.mxu0 0.0
        %1058 = vmatprep.subr.mxu0 0.0
        %1059 = vmatpush1.msra.mxu0 0.0
        %1060 = vmatprep.subr.mxu0 0.0
        %1061 = vmatpush1.msra.mxu0 0.0
        %1062 = vmatprep.subr.mxu0 0.0
        %1063 = vmatpush1.msra.mxu0 0.0
        %1064 = vmatprep.subr.mxu0 0.0
        %1065 = vmatpush1.msra.mxu0 0.0
        %1066 = vmatprep.subr.mxu0 0.0
        %1067 = vmatpush1.msra.mxu0 0.0
        %1068 = vmatprep.subr.mxu0 0.0
        %1069 = vmatpush1.msra.mxu0 0.0
        %1070 = vmatprep.subr.mxu0 0.0
        %1071 = vmatpush1.msra.mxu0 0.0
        %1072 = vmatprep.subr.mxu0 0.0
        %1073 = vmatpush1.msra.mxu0 0.0
        %1074 = vmatprep.subr.mxu0 0.0
        %1075 = vmatpush1.msra.mxu0 0.0
        %1076 = vmatprep.subr.mxu0 0.0
        %1077 = vmatpush1.msra.mxu0 0.0
        %1078 = vmatprep.subr.mxu0 0.0
        %1079 = vmatpush1.msra.mxu0 0.0
        %1080 = vmatprep.subr.mxu0 0.0
        %1081 = vmatpush1.msra.mxu0 0.0
        %1082 = vmatprep.subr.mxu0 0.0
        %1083 = vmatpush1.msra.mxu0 0.0
        %1084 = vmatprep.mubr.f32.mxu0 0.0
        %1085 = vmatmul.mubr.f32.gmra.mrb[0].mxu0 %v1018
        %v1086 = vpop.f32.mrb[0].mxu0
        %v1087 = vadd.f32 0.0, %v1086
        %v1088 = vpop.f32.mrb[0].mxu0
        %1089 = vdwg.mxu0
        %1091 = vrot.lane.b32.xlu0 %v1087, 96
        %v1092 = vpop.permute.xlu0 %1091
        %vm1094 = vcmask 1048320
        %1095 = vst.msk [vmem:[#allocation3] sm:$0xff] %vm1094, %v1092
        %v1096 = vld [vmem:[#allocation3] sm:$0xff]
        %v1097 = vpack.c.bf16 %v1096, %v1096
        %v1098 = vld [vmem:[%s3] sm:$0xf]
        %v1099 = vld [vmem:[%s3 + $0x4] sm:$0xf]
        %v1100 = vld [vmem:[%s3 + $0x8] sm:$0xf]
        %v1101 = vld [vmem:[%s3 + $0xc] sm:$0xf]
        %v1102 = vld [vmem:[%s3 + $0x10] sm:$0xf]
        %v1103 = vld [vmem:[%s3 + $0x14] sm:$0xf]
        %v1104 = vld [vmem:[%s3 + $0x18] sm:$0xf]
        %v1105 = vld [vmem:[%s3 + $0x1c] sm:$0xf]
        %v1106 = vld [vmem:[%s3 + $0x20] sm:$0xf]
        %v1107 = vld [vmem:[%s3 + $0x24] sm:$0xf]
        %v1108 = vld [vmem:[%s3 + $0x28] sm:$0xf]
        %v1109 = vld [vmem:[%s3 + $0x2c] sm:$0xf]
        %v1110 = vld [vmem:[%s3 + $0x30] sm:$0xf]
        %v1111 = vld [vmem:[%s3 + $0x34] sm:$0xf]
        %v1112 = vld [vmem:[%s3 + $0x38] sm:$0xf]
        %v1113 = vld [vmem:[%s3 + $0x3c] sm:$0xf]
        %v1114 = vld [vmem:[%s4] sm:$0x1]
        %v1116 = vlaneseq
        %v1117 = vshrl.u32 %v1116, 7
        %v1118 = vsub.s32 0, %v1117
        %v1119 = vrot.slane %v1114, %v1118
        %v1137 = vunpack.c.l.b16 %v1098
        %v1138 = vunpack.c.l.b16 %v1099
        %v1139 = vunpack.c.l.b16 %v1100
        %v1140 = vunpack.c.l.b16 %v1101
        %v1141 = vunpack.c.l.b16 %v1102
        %v1142 = vunpack.c.l.b16 %v1103
        %v1143 = vunpack.c.l.b16 %v1104
        %v1144 = vunpack.c.l.b16 %v1105
        %v1145 = vunpack.c.l.b16 %v1106
        %v1146 = vunpack.c.l.b16 %v1107
        %v1147 = vunpack.c.l.b16 %v1108
        %v1148 = vunpack.c.l.b16 %v1109
        %v1149 = vunpack.c.l.b16 %v1110
        %v1150 = vunpack.c.l.b16 %v1111
        %v1151 = vunpack.c.l.b16 %v1112
        %v1152 = vunpack.c.l.b16 %v1113
        %v1153 = vpack.c.b16 %v1138, %v1137
        %v1154 = vpack.c.b16 %v1140, %v1139
        %v1155 = vpack.c.b16 %v1142, %v1141
        %v1156 = vpack.c.b16 %v1144, %v1143
        %v1157 = vpack.c.b16 %v1146, %v1145
        %v1158 = vpack.c.b16 %v1148, %v1147
        %v1159 = vpack.c.b16 %v1150, %v1149
        %v1160 = vpack.c.b16 %v1152, %v1151
        %1169 = vmatprep.subr.bf16.mxu0 0
        %1170 = vmatpush1.bf16.msra.mxu0 %v1153
        %1171 = vmatprep.subr.bf16.mxu0 0
        %1172 = vmatpush1.bf16.msra.mxu0 %v1154
        %1173 = vmatprep.subr.bf16.mxu0 0
        %1174 = vmatpush1.bf16.msra.mxu0 %v1155
        %1175 = vmatprep.subr.bf16.mxu0 0
        %1176 = vmatpush1.bf16.msra.mxu0 %v1156
        %1177 = vmatprep.subr.bf16.mxu0 0
        %1178 = vmatpush1.bf16.msra.mxu0 %v1157
        %1179 = vmatprep.subr.bf16.mxu0 0
        %1180 = vmatpush1.bf16.msra.mxu0 %v1158
        %1181 = vmatprep.subr.bf16.mxu0 0
        %1182 = vmatpush1.bf16.msra.mxu0 %v1159
        %1183 = vmatprep.subr.bf16.mxu0 0
        %1184 = vmatpush1.bf16.msra.mxu0 %v1160
        %1185 = vmatprep.subr.bf16.mxu0 0
        %1186 = vmatpush1.bf16.msra.mxu0 0
        %1187 = vmatprep.subr.bf16.mxu0 0
        %1188 = vmatpush1.bf16.msra.mxu0 0
        %1189 = vmatprep.subr.bf16.mxu0 0
        %1190 = vmatpush1.bf16.msra.mxu0 0
        %1191 = vmatprep.subr.bf16.mxu0 0
        %1192 = vmatpush1.bf16.msra.mxu0 0
        %1193 = vmatprep.subr.bf16.mxu0 0
        %1194 = vmatpush1.bf16.msra.mxu0 0
        %1195 = vmatprep.subr.bf16.mxu0 0
        %1196 = vmatpush1.bf16.msra.mxu0 0
        %1197 = vmatprep.subr.bf16.mxu0 0
        %1198 = vmatpush1.bf16.msra.mxu0 0
        %1199 = vmatprep.subr.bf16.mxu0 0
        %1200 = vmatpush1.bf16.msra.mxu0 0
        %1201 = vmatprep.mubr.bf16.mxu0 0
        %1202 = vmatmul.mubr.bf16.gmra.mrb[0].mxu0 %v1097
        %v1203 = vpop.f32.mrb[0].mxu0
        %v1204 = vadd.f32 %v1119, %v1203
        %v1205 = vpop.f32.mrb[0].mxu0
        %v1206 = vpop.f32.mrb[0].mxu0
        %v1207 = vpop.f32.mrb[0].mxu0
        %1208 = vdwg.mxu0
        %1209 = vst.msk [vmem:[%s215] sm:$0xff] %vm280, %v1204
        %s1210 = sand.u32 %s137, 1
        %s1211 = scalar_lea.sflag [#allocation5], %s1210
        %s1212 = sand.u32 %s137, 1
        %s1213 = smul.addr %s1212, 8
        %s1214 = scalar_lea.vmem [#allocation4], %s1213
        // Predicated region
        $region41: #{tpu_custom_call.1} parent=39 // pred_check
          %p1215 = pneg %p147
        $region42: #{tpu_custom_call.1} parent=39 // pred_check_branch
          %1217 = sbr.rel (%p1215) target = $region44
        $region43: #{tpu_custom_call.1} parent=39 // pred_region
          %s1219 = ssub.s32 128, 128
          %1220 = vsyncadd %s1211, %s1219
          %s1221 = smul.addr %s19, 128
          %s1222 = scalar_lea.hbm %s5, %s1221
          %s1224 = sshll.u32 %s1214, 4
          %s1225 = int_to_ptr.vmem [resolvable:$true] %s1224
          %1227 = dma.vmem_to_hbm [thread:$0]  %s1225, 128, %s1222, %s1211
        $region44: #{tpu_custom_call.1} parent=39 // pred_fallthru
          _
      $region40: #{tpu_custom_call.1} parent=5 // pred_fallthru
        _
      %p1228 = scmp.le.s32.totalorder 2, %s14
      // Predicated region
      $region45: #{tpu_custom_call.1} parent=5 // pred_check
        %p1229 = pneg %p1228
      $region46: #{tpu_custom_call.1} parent=5 // pred_check_branch
        %1231 = sbr.rel (%p1229) target = $region48
      $region47: #{tpu_custom_call.1} parent=5 // pred_region
        %s1232 = ssub.s32 %s14, 2
        // Predicated region
        $region49: #{tpu_custom_call.1} parent=47 // pred_check
          %p1233 = pneg %p153
        $region50: #{tpu_custom_call.1} parent=47 // pred_check_branch
          %1235 = sbr.rel (%p1233) target = $region52
        $region51: #{tpu_custom_call.1} parent=47 // pred_region
          %s1236 = sand.u32 %s138, 1
          %s1237 = scalar_lea.sflag [#allocation5], %s1236
          %s1238 = sand.u32 %s138, 1
          %s1239 = smul.addr %s1238, 8
          %s1240 = scalar_lea.vmem [#allocation4], %s1239
          %1241 = dma.done %s1237, 128
        $region52: #{tpu_custom_call.1} parent=47 // pred_fallthru
          _
      $region48: #{tpu_custom_call.1} parent=5 // pred_fallthru
        _
    $region6: #{tpu_custom_call.1} parent=1 // loop_footer
      %s18 = sadd.s32 1, %s14
    $region7: #{tpu_custom_call.1} parent=1 // loop_footer_branch
      %13 = sbr.rel target = $region3
    $region8: #{tpu_custom_call.1} parent=1 // loop_exit
      _
    %1242 = vsyncpa [#allocation5], 1
    %s1243 = scalar_lea.sflag [#allocation5], 1
    %1244 = vsyncpa %s1243, 1

</llo_original>
